<compile_context>
chip_gen: v7x
topology: tpu7x:2x2x1
jax: 0.10.0
libtpu: 0.0.40
codegen_flags: <defaults>
</compile_context>

<pallas_src>
import functools
import math

import jax
import jax.numpy as jnp
from jax.experimental import pallas as pl
from jax.experimental.pallas import tpu as pltpu


# ----------------------------------------------------------------------------
# Tiling / compiler-param helpers
# ----------------------------------------------------------------------------
def _tile(dim, target):
    """Use the full dim if it fits the target, else the (8/128-aligned) target."""
    return dim if dim <= target else target


def _mosaic_params(dim_sem, block_bytes):
    """CompilerParams with an explicit, generously padded VMEM limit.

    x3 covers double-buffering plus (8,128) layout padding; 16 MiB margin
    covers Mosaic internal scratch. Never set below the smallest default.
    """
    need = 3 * int(sum(block_bytes)) + (16 << 20)
    return pltpu.CompilerParams(
        dimension_semantics=dim_sem,
        vmem_limit_bytes=int(min(need, 112 << 20)),
    )


# ----------------------------------------------------------------------------
# Kernel 1: fused Q/K/V projection.
#   yq = q @ Wq + bq ; yk = k @ Wk + bk ; yv = v @ Wv + bv
# One pallas_call; grid = (N tiles, M tiles) -> weight-stationary: the three
# weight/bias tiles (index depends only on the outer axis) stay VMEM-resident
# across the inner M sweep.
# ----------------------------------------------------------------------------
def _qkv_kernel(q_ref, k_ref, v_ref,
                wq_ref, wk_ref, wv_ref,
                bq_ref, bk_ref, bv_ref,
                yq_ref, yk_ref, yv_ref):
    for x_ref, w_ref, b_ref, y_ref in (
        (q_ref, wq_ref, bq_ref, yq_ref),
        (k_ref, wk_ref, bk_ref, yk_ref),
        (v_ref, wv_ref, bv_ref, yv_ref),
    ):
        acc = jnp.dot(x_ref[...], w_ref[...], preferred_element_type=jnp.float32)
        y_ref[...] = (acc + b_ref[...].astype(jnp.float32)).astype(y_ref.dtype)


def qkv_project(q2d, k2d, v2d, wq, wk, wv, bq, bk, bv, *, tm=512, tn=512):
    M, K = q2d.shape
    N = wq.shape[1]
    tm = _tile(M, tm)
    tn = _tile(N, tn)
    dsz = q2d.dtype.itemsize
    wsz = wq.dtype.itemsize

    act_spec = pl.BlockSpec((tm, K), lambda j, i: (i, 0))
    w_spec = pl.BlockSpec((K, tn), lambda j, i: (0, j))   # constant over inner axis
    b_spec = pl.BlockSpec((1, tn), lambda j, i: (0, j))
    out_spec = pl.BlockSpec((tm, tn), lambda j, i: (i, j))
    out_sd = jax.ShapeDtypeStruct((M, N), q2d.dtype)

    block_bytes = (3 * tm * K * dsz, 3 * K * tn * wsz,
                   3 * tn * wsz, 3 * tm * tn * dsz)
    return pl.pallas_call(
        _qkv_kernel,
        out_shape=(out_sd, out_sd, out_sd),
        grid=(pl.cdiv(N, tn), pl.cdiv(M, tm)),
        in_specs=[act_spec] * 3 + [w_spec] * 3 + [b_spec] * 3,
        out_specs=(out_spec, out_spec, out_spec),
        compiler_params=_mosaic_params(("parallel", "parallel"), block_bytes),
    )(q2d, k2d, v2d, wq, wk, wv,
      bq.reshape(1, N), bk.reshape(1, N), bv.reshape(1, N))


# ----------------------------------------------------------------------------
# Kernel 2: tiled linear  y = x @ W + b  (output projection), weight-stationary
# ----------------------------------------------------------------------------
def _linear_kernel(x_ref, w_ref, b_ref, o_ref):
    acc = jnp.dot(x_ref[...], w_ref[...], preferred_element_type=jnp.float32)
    o_ref[...] = (acc + b_ref[...].astype(jnp.float32)).astype(o_ref.dtype)


def linear(x2d, w, b, *, tm=512, tn=512):
    M, K = x2d.shape
    N = w.shape[1]
    tm = _tile(M, tm)
    tn = _tile(N, tn)
    dsz = x2d.dtype.itemsize
    block_bytes = (tm * K * dsz, K * tn * w.dtype.itemsize,
                   tn * w.dtype.itemsize, tm * tn * dsz)
    return pl.pallas_call(
        _linear_kernel,
        out_shape=jax.ShapeDtypeStruct((M, N), x2d.dtype),
        grid=(pl.cdiv(N, tn), pl.cdiv(M, tm)),   # weight-stationary: N outer, M inner
        in_specs=[
            pl.BlockSpec((tm, K), lambda j, i: (i, 0)),
            pl.BlockSpec((K, tn), lambda j, i: (0, j)),
            pl.BlockSpec((1, tn), lambda j, i: (0, j)),
        ],
        out_specs=pl.BlockSpec((tm, tn), lambda j, i: (i, j)),
        compiler_params=_mosaic_params(("parallel", "parallel"), block_bytes),
    )(x2d, w, b.reshape(1, N))


# ----------------------------------------------------------------------------
# Kernel 3: per-head scaled-dot-product attention.
#   Inputs are head-major (bs, h, S, d_k); grid = (batch tiles, heads); each
#   step processes one head of a batch block and writes its output / att block
#   directly (no concat, no per-head temps kept live).
# ----------------------------------------------------------------------------
def _make_attention_kernel(d_k, with_att):
    scale = 1.0 / math.sqrt(d_k)

    def kernel(q_ref, k_ref, v_ref, o_ref, *att_refs):
        # Blocks are (Bb, 1, S, d_k); squeeze the singleton head dim.
        q = q_ref[:, 0] * scale          # fold 1/sqrt(d_k) into q (O(S*d_k))
        k = k_ref[:, 0]
        v = v_ref[:, 0]
        s = jnp.einsum("bqd,bkd->bqk", q, k,
                       preferred_element_type=jnp.float32)
        m = jnp.max(s, axis=-1, keepdims=True)
        e = jnp.exp(s - m)
        # approx reciprocal runs on the EUP slot (VALU stays free for exp/softmax)
        p = e * pl.reciprocal(jnp.sum(e, axis=-1, keepdims=True), approx=True)
        if with_att:
            att_refs[0][:, 0, :, :] = p.astype(att_refs[0].dtype)
        o = jnp.einsum("bqk,bkd->bqd", p.astype(v.dtype), v,
                       preferred_element_type=jnp.float32)
        o_ref[:, 0, :, :] = o.astype(o_ref.dtype)

    return kernel


def attention(q_h, k_h, v_h, return_att=False):
    bs, h, sq, d_k = q_h.shape
    dsz = q_h.dtype.itemsize
    # Batch several rows per step so the per-head matmuls see ~256 rows (the
    # MXU depth/width is already limited to d_k=32), while keeping the per-head
    # f32 (Bb, S, S) scores comfortably inside VMEM.
    Bb = max(1, min(bs, 256 // max(sq, 1), (4 << 20) // max(sq * sq * 4, 1)))

    kernel = _make_attention_kernel(d_k, return_att)
    in_spec = pl.BlockSpec((Bb, 1, sq, d_k), lambda b, hd: (b, hd, 0, 0))
    o_spec = pl.BlockSpec((Bb, 1, sq, d_k), lambda b, hd: (b, hd, 0, 0))
    block_bytes = [4 * Bb * sq * d_k * dsz, Bb * sq * sq * 4]  # q/k/v/o + f32 scores

    if return_att:
        # att stored in the input dtype (not forced f32) — it is the dominant
        # HBM write stream when requested.
        out_shape = (jax.ShapeDtypeStruct((bs, h, sq, d_k), q_h.dtype),
                     jax.ShapeDtypeStruct((bs, h, sq, sq), q_h.dtype))
        out_specs = (o_spec,
                     pl.BlockSpec((Bb, 1, sq, sq), lambda b, hd: (b, hd, 0, 0)))
        block_bytes.append(Bb * sq * sq * dsz)
    else:
        out_shape = jax.ShapeDtypeStruct((bs, h, sq, d_k), q_h.dtype)
        out_specs = o_spec

    res = pl.pallas_call(
        kernel,
        out_shape=out_shape,
        grid=(pl.cdiv(bs, Bb), h),
        in_specs=[in_spec, in_spec, in_spec],
        out_specs=out_specs,
        compiler_params=_mosaic_params(("parallel", "parallel"), block_bytes),
    )(q_h, k_h, v_h)

    if return_att:
        return res            # (out, att)
    return res, None


# ----------------------------------------------------------------------------
# Module-level wrapper mirroring MultiHeadedAttention.forward
# ----------------------------------------------------------------------------
def init_params(key, d_model):
    """Deterministic init matching nn.Linear default (uniform +-1/sqrt(fan_in)).
    Weights stored as (in_features, out_features)."""
    bound = 1.0 / math.sqrt(d_model)
    params = []
    for _ in range(4):
        key, kw, kb = jax.random.split(key, 3)
        w = jax.random.uniform(kw, (d_model, d_model), jnp.float32, -bound, bound)
        b = jax.random.uniform(kb, (d_model,), jnp.float32, -bound, bound)
        params.append((w, b))
    return params  # [(Wq,bq), (Wk,bk), (Wv,bv), (Wo,bo)]


def multi_headed_attention(q, k, v, params, d_k=32, return_att=False):
    bs, sq, d_model = q.shape
    assert k.shape == q.shape and v.shape == q.shape  # TODO(synk): cross-attention lengths
    h = d_model // d_k
    (wq, bq), (wk, bk), (wv, bv), (wo, bo) = params

    M = bs * sq
    # Fused, weight-stationary Q/K/V projections (one pallas_call).
    yq, yk, yv = qkv_project(
        q.reshape(M, d_model), k.reshape(M, d_model), v.reshape(M, d_model),
        wq, wk, wv, bq, bk, bv)

    # Head split (XLA transpose, one streaming pass per tensor): the per-head
    # attention grid needs a head-major layout because Mosaic can't do
    # dynamic (head-indexed) slicing along the lane dimension.
    def split(y):
        return y.reshape(bs, sq, h, d_k).transpose(0, 2, 1, 3)   # (bs, h, sq, d_k)

    out_h, att = attention(split(yq), split(yk), split(yv), return_att=return_att)

    # Head merge (inverse transpose), then the weight-stationary output projection.
    out = out_h.transpose(0, 2, 1, 3).reshape(M, d_model)
    out_att = linear(out, wo, bo).reshape(bs, sq, d_model)
    return out_att, att


# ----------------------------------------------------------------------------
# Pure-JAX reference for correctness check
# ----------------------------------------------------------------------------
def reference(q, k, v, params, d_k=32):
    bs, sq, d_model = q.shape
    h = d_model // d_k
    (wq, bq), (wk, bk), (wv, bv), (wo, bo) = params

    def proj(x, w, b):
        y = x.reshape(bs * sq, d_model) @ w + b
        return y.reshape(bs, sq, h, d_k).transpose(0, 2, 1, 3)

    qh, kh, vh = proj(q, wq, bq), proj(k, wk, bk), proj(v, wv, bv)
    scores = jnp.einsum("bhqd,bhkd->bhqk", qh, kh) / math.sqrt(d_k)
    p = jax.nn.softmax(scores, axis=-1)
    out = jnp.einsum("bhqk,bhkd->bhqd", p, vh)
    out = out.transpose(0, 2, 1, 3).reshape(bs, sq, d_model)
    out = out.reshape(bs * sq, d_model) @ wo + bo
    return out.reshape(bs, sq, d_model), p


if __name__ == "__main__":
    key = jax.random.PRNGKey(0)
    bs, seq, d_model = 2, 8, 64  # h = 2 heads of d_k = 32

    kq, kk, kv, kp = jax.random.split(key, 4)
    q = jax.random.normal(kq, (bs, seq, d_model), jnp.float32)
    k = jax.random.normal(kk, (bs, seq, d_model), jnp.float32)
    v = jax.random.normal(kv, (bs, seq, d_model), jnp.float32)
    params = init_params(kp, d_model)

    # Default fast path: no attention-weights writeback.
    fast = jax.jit(multi_headed_attention)
    out_fast, _ = fast(q, k, v, params)
    out_fast = jax.block_until_ready(out_fast)

    # Full path: also materialize the attention weights (mirrors self.att_weights).
    full = jax.jit(functools.partial(multi_headed_attention, return_att=True))
    out, att = full(q, k, v, params)
    out = jax.block_until_ready(out)
    att = jax.block_until_ready(att)

    ref_out, ref_att = reference(q, k, v, params)
    h = d_model // 32
    assert out.shape == (bs, seq, d_model)
    assert att.shape == (bs, h, seq, seq)
    # approx reciprocal (EUP) has ~2^-12 relative error -> relaxed tolerances.
    assert jnp.allclose(out, ref_out, atol=2e-3, rtol=2e-3), "output mismatch vs reference"
    assert jnp.allclose(out_fast, ref_out, atol=2e-3, rtol=2e-3), "fast-path output mismatch"
    assert jnp.allclose(att, ref_att, atol=1e-3, rtol=1e-3), "attention weights mismatch vs reference"

    print("KERNEL_OK")
</pallas_src>

<mosaic_0001>
module attributes {stable_mosaic.version = 11 : i64} {
  func.func @_qkv_kernel(%arg0: i32, %arg1: i32, %arg2: memref<16x64xf32, #tpu.memory_space<vmem>>, %arg3: memref<16x64xf32, #tpu.memory_space<vmem>>, %arg4: memref<16x64xf32, #tpu.memory_space<vmem>>, %arg5: memref<64x64xf32, #tpu.memory_space<vmem>>, %arg6: memref<64x64xf32, #tpu.memory_space<vmem>>, %arg7: memref<64x64xf32, #tpu.memory_space<vmem>>, %arg8: memref<1x64xf32, #tpu.memory_space<vmem>>, %arg9: memref<1x64xf32, #tpu.memory_space<vmem>>, %arg10: memref<1x64xf32, #tpu.memory_space<vmem>>, %arg11: memref<16x64xf32, #tpu.memory_space<vmem>>, %arg12: memref<16x64xf32, #tpu.memory_space<vmem>>, %arg13: memref<16x64xf32, #tpu.memory_space<vmem>>) attributes {dimension_semantics = [#tpu.dimension_semantics<parallel>, #tpu.dimension_semantics<parallel>], iteration_bounds = array<i64: 1, 1>, scalar_prefetch = 0 : i64, scratch_operands = 0 : i64, tpu.core_type = #tpu.core_type<tc>, window_params = [{transform_indices = @transform_0, window_bounds = array<i64: 16, 64>}, {transform_indices = @transform_1, window_bounds = array<i64: 16, 64>}, {transform_indices = @transform_2, window_bounds = array<i64: 16, 64>}, {transform_indices = @transform_3, window_bounds = array<i64: 64, 64>}, {transform_indices = @transform_4, window_bounds = array<i64: 64, 64>}, {transform_indices = @transform_5, window_bounds = array<i64: 64, 64>}, {transform_indices = @transform_6, window_bounds = array<i64: 1, 64>}, {transform_indices = @transform_7, window_bounds = array<i64: 1, 64>}, {transform_indices = @transform_8, window_bounds = array<i64: 1, 64>}, {transform_indices = @transform_9, window_bounds = array<i64: 16, 64>}, {transform_indices = @transform_10, window_bounds = array<i64: 16, 64>}, {transform_indices = @transform_11, window_bounds = array<i64: 16, 64>}]} {
    %c0 = arith.constant 0 : index
    %c0_0 = arith.constant 0 : index
    %0 = vector.load %arg2[%c0, %c0_0] : memref<16x64xf32, #tpu.memory_space<vmem>>, vector<16x64xf32>
    %c0_1 = arith.constant 0 : index
    %c0_2 = arith.constant 0 : index
    %1 = vector.load %arg5[%c0_1, %c0_2] : memref<64x64xf32, #tpu.memory_space<vmem>>, vector<64x64xf32>
    %cst = arith.constant dense<0.000000e+00> : vector<16x64xf32>
    %2 = tpu.matmul %0, %1, %cst {dimension_numbers = #tpu.dot_dimension_numbers<[1], [0], [0], [1], [0, 0, 1, 1], [], []>} : vector<16x64xf32>, vector<64x64xf32>, vector<16x64xf32> -> vector<16x64xf32>
    %c0_3 = arith.constant 0 : index
    %c0_4 = arith.constant 0 : index
    %3 = vector.load %arg8[%c0_3, %c0_4] : memref<1x64xf32, #tpu.memory_space<vmem>>, vector<1x64xf32>
    %4 = vector.broadcast %3 : vector<1x64xf32> to vector<16x64xf32>
    %5 = arith.addf %2, %4 : vector<16x64xf32>
    %c0_5 = arith.constant 0 : index
    %c0_6 = arith.constant 0 : index
    %6 = vector.load %arg11[%c0_5, %c0_6] : memref<16x64xf32, #tpu.memory_space<vmem>>, vector<16x64xf32>
    tpu.vector_store %arg11[%c0_5, %c0_6], %5 {strides = array<i32>} : memref<16x64xf32, #tpu.memory_space<vmem>>, vector<16x64xf32>,
    %c0_7 = arith.constant 0 : index
    %c0_8 = arith.constant 0 : index
    %7 = vector.load %arg3[%c0_7, %c0_8] : memref<16x64xf32, #tpu.memory_space<vmem>>, vector<16x64xf32>
    %c0_9 = arith.constant 0 : index
    %c0_10 = arith.constant 0 : index
    %8 = vector.load %arg6[%c0_9, %c0_10] : memref<64x64xf32, #tpu.memory_space<vmem>>, vector<64x64xf32>
    %cst_11 = arith.constant dense<0.000000e+00> : vector<16x64xf32>
    %9 = tpu.matmul %7, %8, %cst_11 {dimension_numbers = #tpu.dot_dimension_numbers<[1], [0], [0], [1], [0, 0, 1, 1], [], []>} : vector<16x64xf32>, vector<64x64xf32>, vector<16x64xf32> -> vector<16x64xf32>
    %c0_12 = arith.constant 0 : index
    %c0_13 = arith.constant 0 : index
    %10 = vector.load %arg9[%c0_12, %c0_13] : memref<1x64xf32, #tpu.memory_space<vmem>>, vector<1x64xf32>
    %11 = vector.broadcast %10 : vector<1x64xf32> to vector<16x64xf32>
    %12 = arith.addf %9, %11 : vector<16x64xf32>
    %c0_14 = arith.constant 0 : index
    %c0_15 = arith.constant 0 : index
    %13 = vector.load %arg12[%c0_14, %c0_15] : memref<16x64xf32, #tpu.memory_space<vmem>>, vector<16x64xf32>
    tpu.vector_store %arg12[%c0_14, %c0_15], %12 {strides = array<i32>} : memref<16x64xf32, #tpu.memory_space<vmem>>, vector<16x64xf32>,
    %c0_16 = arith.constant 0 : index
    %c0_17 = arith.constant 0 : index
    %14 = vector.load %arg4[%c0_16, %c0_17] : memref<16x64xf32, #tpu.memory_space<vmem>>, vector<16x64xf32>
    %c0_18 = arith.constant 0 : index
    %c0_19 = arith.constant 0 : index
    %15 = vector.load %arg7[%c0_18, %c0_19] : memref<64x64xf32, #tpu.memory_space<vmem>>, vector<64x64xf32>
    %cst_20 = arith.constant dense<0.000000e+00> : vector<16x64xf32>
    %16 = tpu.matmul %14, %15, %cst_20 {dimension_numbers = #tpu.dot_dimension_numbers<[1], [0], [0], [1], [0, 0, 1, 1], [], []>} : vector<16x64xf32>, vector<64x64xf32>, vector<16x64xf32> -> vector<16x64xf32>
    %c0_21 = arith.constant 0 : index
    %c0_22 = arith.constant 0 : index
    %17 = vector.load %arg10[%c0_21, %c0_22] : memref<1x64xf32, #tpu.memory_space<vmem>>, vector<1x64xf32>
    %18 = vector.broadcast %17 : vector<1x64xf32> to vector<16x64xf32>
    %19 = arith.addf %16, %18 : vector<16x64xf32>
    %c0_23 = arith.constant 0 : index
    %c0_24 = arith.constant 0 : index
    %20 = vector.load %arg13[%c0_23, %c0_24] : memref<16x64xf32, #tpu.memory_space<vmem>>, vector<16x64xf32>
    tpu.vector_store %arg13[%c0_23, %c0_24], %19 {strides = array<i32>} : memref<16x64xf32, #tpu.memory_space<vmem>>, vector<16x64xf32>,
    return
  }
  func.func @transform_0(%arg0: i32, %arg1: i32) -> (i32, i32) {
    %c0_i32 = arith.constant 0 : i32
    %c0_i32_0 = arith.constant 0 : i32
    return %arg1, %c0_i32 : i32, i32
  }
  func.func @transform_1(%arg0: i32, %arg1: i32) -> (i32, i32) {
    %c0_i32 = arith.constant 0 : i32
    %c0_i32_0 = arith.constant 0 : i32
    return %arg1, %c0_i32 : i32, i32
  }
  func.func @transform_2(%arg0: i32, %arg1: i32) -> (i32, i32) {
    %c0_i32 = arith.constant 0 : i32
    %c0_i32_0 = arith.constant 0 : i32
    return %arg1, %c0_i32 : i32, i32
  }
  func.func @transform_3(%arg0: i32, %arg1: i32) -> (i32, i32) {
    %c0_i32 = arith.constant 0 : i32
    %c0_i32_0 = arith.constant 0 : i32
    return %c0_i32, %arg0 : i32, i32
  }
  func.func @transform_4(%arg0: i32, %arg1: i32) -> (i32, i32) {
    %c0_i32 = arith.constant 0 : i32
    %c0_i32_0 = arith.constant 0 : i32
    return %c0_i32, %arg0 : i32, i32
  }
  func.func @transform_5(%arg0: i32, %arg1: i32) -> (i32, i32) {
    %c0_i32 = arith.constant 0 : i32
    %c0_i32_0 = arith.constant 0 : i32
    return %c0_i32, %arg0 : i32, i32
  }
  func.func @transform_6(%arg0: i32, %arg1: i32) -> (i32, i32) {
    %c0_i32 = arith.constant 0 : i32
    %c0_i32_0 = arith.constant 0 : i32
    return %c0_i32, %arg0 : i32, i32
  }
  func.func @transform_7(%arg0: i32, %arg1: i32) -> (i32, i32) {
    %c0_i32 = arith.constant 0 : i32
    %c0_i32_0 = arith.constant 0 : i32
    return %c0_i32, %arg0 : i32, i32
  }
  func.func @transform_8(%arg0: i32, %arg1: i32) -> (i32, i32) {
    %c0_i32 = arith.constant 0 : i32
    %c0_i32_0 = arith.constant 0 : i32
    return %c0_i32, %arg0 : i32, i32
  }
  func.func @transform_9(%arg0: i32, %arg1: i32) -> (i32, i32) {
    %c0_i32 = arith.constant 0 : i32
    return %arg1, %arg0 : i32, i32
  }
  func.func @transform_10(%arg0: i32, %arg1: i32) -> (i32, i32) {
    %c0_i32 = arith.constant 0 : i32
    return %arg1, %arg0 : i32, i32
  }
  func.func @transform_11(%arg0: i32, %arg1: i32) -> (i32, i32) {
    %c0_i32 = arith.constant 0 : i32
    return %arg1, %arg0 : i32, i32
  }
}

module attributes {stable_mosaic.version = 11 : i64} {
  func.func @kernel(%arg0: i32, %arg1: i32, %arg2: memref<2x1x8x32xf32, #tpu.memory_space<vmem>>, %arg3: memref<2x1x8x32xf32, #tpu.memory_space<vmem>>, %arg4: memref<2x1x8x32xf32, #tpu.memory_space<vmem>>, %arg5: memref<2x1x8x32xf32, #tpu.memory_space<vmem>>) attributes {dimension_semantics = [#tpu.dimension_semantics<parallel>, #tpu.dimension_semantics<parallel>], iteration_bounds = array<i64: 1, 2>, scalar_prefetch = 0 : i64, scratch_operands = 0 : i64, tpu.core_type = #tpu.core_type<tc>, window_params = [{transform_indices = @transform_0, window_bounds = array<i64: 2, 1, 8, 32>}, {transform_indices = @transform_1, window_bounds = array<i64: 2, 1, 8, 32>}, {transform_indices = @transform_2, window_bounds = array<i64: 2, 1, 8, 32>}, {transform_indices = @transform_3, window_bounds = array<i64: 2, 1, 8, 32>}]} {
    %c0 = arith.constant 0 : index
    %c0_0 = arith.constant 0 : index
    %c0_1 = arith.constant 0 : index
    %c0_2 = arith.constant 0 : index
    %0 = vector.load %arg2[%c0, %c0_0, %c0_1, %c0_2] : memref<2x1x8x32xf32, #tpu.memory_space<vmem>>, vector<2x1x8x32xf32>
    %1 = vector.shape_cast %0 : vector<2x1x8x32xf32> to vector<2x8x32xf32>
    %cst = arith.constant 0.176776692 : f32
    %2 = vector.broadcast %cst : f32 to vector<2x8x32xf32>
    %3 = arith.mulf %1, %2 : vector<2x8x32xf32>
    %c0_3 = arith.constant 0 : index
    %c0_4 = arith.constant 0 : index
    %c0_5 = arith.constant 0 : index
    %c0_6 = arith.constant 0 : index
    %4 = vector.load %arg3[%c0_3, %c0_4, %c0_5, %c0_6] : memref<2x1x8x32xf32, #tpu.memory_space<vmem>>, vector<2x1x8x32xf32>
    %5 = vector.shape_cast %4 : vector<2x1x8x32xf32> to vector<2x8x32xf32>
    %c0_7 = arith.constant 0 : index
    %c0_8 = arith.constant 0 : index
    %c0_9 = arith.constant 0 : index
    %c0_10 = arith.constant 0 : index
    %6 = vector.load %arg4[%c0_7, %c0_8, %c0_9, %c0_10] : memref<2x1x8x32xf32, #tpu.memory_space<vmem>>, vector<2x1x8x32xf32>
    %7 = vector.shape_cast %6 : vector<2x1x8x32xf32> to vector<2x8x32xf32>
    "tpu.trace_start"() <{level = 10 : i32, message = "bqd,bkd->bqk"}> : () -> ()
    %cst_11 = arith.constant dense<0.000000e+00> : vector<2x8x8xf32>
    %8 = tpu.matmul %3, %5, %cst_11 {dimension_numbers = #tpu.dot_dimension_numbers<[2], [2], [1], [1], [0, 0, 0, 1, 1, 1], [0], [0]>} : vector<2x8x32xf32>, vector<2x8x32xf32>, vector<2x8x8xf32> -> vector<2x8x8xf32>
    "tpu.trace_stop"() : () -> ()
    %cst_12 = arith.constant dense<0xFF800000> : vector<2x8xf32>
    %9 = vector.multi_reduction <maximumf>, %8, %cst_12 [2] : vector<2x8x8xf32> to vector<2x8xf32>
    %10 = vector.shape_cast %9 : vector<2x8xf32> to vector<2x8x1xf32>
    %11 = vector.broadcast %10 : vector<2x8x1xf32> to vector<2x8x8xf32>
    %12 = arith.subf %8, %11 : vector<2x8x8xf32>
    %13 = math.exp %12 : vector<2x8x8xf32>
    %cst_13 = arith.constant dense<0.000000e+00> : vector<2x8xf32>
    %14 = vector.multi_reduction <add>, %13, %cst_13 [2] : vector<2x8x8xf32> to vector<2x8xf32>
    %15 = vector.shape_cast %14 : vector<2x8xf32> to vector<2x8x1xf32>
    %16 = tpu.reciprocal %15 {approx = true} : vector<2x8x1xf32> -> vector<2x8x1xf32>
    %17 = vector.broadcast %16 : vector<2x8x1xf32> to vector<2x8x8xf32>
    %18 = arith.mulf %13, %17 : vector<2x8x8xf32>
    "tpu.trace_start"() <{level = 10 : i32, message = "bqk,bkd->bqd"}> : () -> ()
    %cst_14 = arith.constant dense<0.000000e+00> : vector<2x8x32xf32>
    %19 = tpu.matmul %18, %7, %cst_14 {dimension_numbers = #tpu.dot_dimension_numbers<[2], [1], [1], [2], [0, 0, 0, 1, 1, 2], [0], [0]>} : vector<2x8x8xf32>, vector<2x8x32xf32>, vector<2x8x32xf32> -> vector<2x8x32xf32>
    "tpu.trace_stop"() : () -> ()
    %c0_15 = arith.constant 0 : index
    %c0_16 = arith.constant 0 : index
    %c0_17 = arith.constant 0 : index
    %c0_18 = arith.constant 0 : index
    %20 = vector.load %arg5[%c0_15, %c0_16, %c0_17, %c0_18] : memref<2x1x8x32xf32, #tpu.memory_space<vmem>>, vector<2x1x8x32xf32>
    %21 = vector.shape_cast %20 : vector<2x1x8x32xf32> to vector<2x8x32xf32>
    %22 = vector.shape_cast %19 : vector<2x8x32xf32> to vector<2x1x8x32xf32>
    tpu.vector_store %arg5[%c0_15, %c0_16, %c0_17, %c0_18], %22 {strides = array<i32>} : memref<2x1x8x32xf32, #tpu.memory_space<vmem>>, vector<2x1x8x32xf32>,
    return
  }
  func.func @transform_0(%arg0: i32, %arg1: i32) -> (i32, i32, i32, i32) {
    %c0_i32 = arith.constant 0 : i32
    %c0_i32_0 = arith.constant 0 : i32
    %c0_i32_1 = arith.constant 0 : i32
    return %arg0, %arg1, %c0_i32, %c0_i32_0 : i32, i32, i32, i32
  }
  func.func @transform_1(%arg0: i32, %arg1: i32) -> (i32, i32, i32, i32) {
    %c0_i32 = arith.constant 0 : i32
    %c0_i32_0 = arith.constant 0 : i32
    %c0_i32_1 = arith.constant 0 : i32
    return %arg0, %arg1, %c0_i32, %c0_i32_0 : i32, i32, i32, i32
  }
  func.func @transform_2(%arg0: i32, %arg1: i32) -> (i32, i32, i32, i32) {
    %c0_i32 = arith.constant 0 : i32
    %c0_i32_0 = arith.constant 0 : i32
    %c0_i32_1 = arith.constant 0 : i32
    return %arg0, %arg1, %c0_i32, %c0_i32_0 : i32, i32, i32, i32
  }
  func.func @transform_3(%arg0: i32, %arg1: i32) -> (i32, i32, i32, i32) {
    %c0_i32 = arith.constant 0 : i32
    %c0_i32_0 = arith.constant 0 : i32
    %c0_i32_1 = arith.constant 0 : i32
    return %arg0, %arg1, %c0_i32, %c0_i32_0 : i32, i32, i32, i32
  }
}

module attributes {stable_mosaic.version = 11 : i64} {
  func.func @_linear_kernel(%arg0: i32, %arg1: i32, %arg2: memref<16x64xf32, #tpu.memory_space<vmem>>, %arg3: memref<64x64xf32, #tpu.memory_space<vmem>>, %arg4: memref<1x64xf32, #tpu.memory_space<vmem>>, %arg5: memref<16x64xf32, #tpu.memory_space<vmem>>) attributes {dimension_semantics = [#tpu.dimension_semantics<parallel>, #tpu.dimension_semantics<parallel>], iteration_bounds = array<i64: 1, 1>, scalar_prefetch = 0 : i64, scratch_operands = 0 : i64, tpu.core_type = #tpu.core_type<tc>, window_params = [{transform_indices = @transform_0, window_bounds = array<i64: 16, 64>}, {transform_indices = @transform_1, window_bounds = array<i64: 64, 64>}, {transform_indices = @transform_2, window_bounds = array<i64: 1, 64>}, {transform_indices = @transform_3, window_bounds = array<i64: 16, 64>}]} {
    %c0 = arith.constant 0 : index
    %c0_0 = arith.constant 0 : index
    %0 = vector.load %arg2[%c0, %c0_0] : memref<16x64xf32, #tpu.memory_space<vmem>>, vector<16x64xf32>
    %c0_1 = arith.constant 0 : index
    %c0_2 = arith.constant 0 : index
    %1 = vector.load %arg3[%c0_1, %c0_2] : memref<64x64xf32, #tpu.memory_space<vmem>>, vector<64x64xf32>
    %cst = arith.constant dense<0.000000e+00> : vector<16x64xf32>
    %2 = tpu.matmul %0, %1, %cst {dimension_numbers = #tpu.dot_dimension_numbers<[1], [0], [0], [1], [0, 0, 1, 1], [], []>} : vector<16x64xf32>, vector<64x64xf32>, vector<16x64xf32> -> vector<16x64xf32>
    %c0_3 = arith.constant 0 : index
    %c0_4 = arith.constant 0 : index
    %3 = vector.load %arg4[%c0_3, %c0_4] : memref<1x64xf32, #tpu.memory_space<vmem>>, vector<1x64xf32>
    %4 = vector.broadcast %3 : vector<1x64xf32> to vector<16x64xf32>
    %5 = arith.addf %2, %4 : vector<16x64xf32>
    %c0_5 = arith.constant 0 : index
    %c0_6 = arith.constant 0 : index
    %6 = vector.load %arg5[%c0_5, %c0_6] : memref<16x64xf32, #tpu.memory_space<vmem>>, vector<16x64xf32>
    tpu.vector_store %arg5[%c0_5, %c0_6], %5 {strides = array<i32>} : memref<16x64xf32, #tpu.memory_space<vmem>>, vector<16x64xf32>,
    return
  }
  func.func @transform_0(%arg0: i32, %arg1: i32) -> (i32, i32) {
    %c0_i32 = arith.constant 0 : i32
    %c0_i32_0 = arith.constant 0 : i32
    return %arg1, %c0_i32 : i32, i32
  }
  func.func @transform_1(%arg0: i32, %arg1: i32) -> (i32, i32) {
    %c0_i32 = arith.constant 0 : i32
    %c0_i32_0 = arith.constant 0 : i32
    return %c0_i32, %arg0 : i32, i32
  }
  func.func @transform_2(%arg0: i32, %arg1: i32) -> (i32, i32) {
    %c0_i32 = arith.constant 0 : i32
    %c0_i32_0 = arith.constant 0 : i32
    return %c0_i32, %arg0 : i32, i32
  }
  func.func @transform_3(%arg0: i32, %arg1: i32) -> (i32, i32) {
    %c0_i32 = arith.constant 0 : i32
    return %arg1, %arg0 : i32, i32
  }
}

</mosaic_0001>

<llo_original>
// kernel: multi_headed_attention.3
$region0: #{multi_headed_attention.3}
  #allocation0 [shape = 'u32[]', space=smem, size = 0x4, offset = 0x4, fixed_abs, tag = 'smem constant byte address 0x4 - core index']
  #allocation1 [shape = 'u32[144,128]{1,0:T(1,128)}', space=vmem, size = 0x12000, scoped, tag = 'internal scratch']
  %s0 = inlined_call_operand.vmem [shape: f32[16,64], index: 0, kind: input, shape index: {}]
  %s1 = inlined_call_operand.vmem [shape: f32[16,64], index: 1, kind: input, shape index: {}]
  %s2 = inlined_call_operand.vmem [shape: f32[16,64], index: 2, kind: input, shape index: {}]
  %s3 = inlined_call_operand.hbm [shape: f32[64,64], index: 3, kind: input, shape index: {}]
  %s4 = inlined_call_operand.hbm [shape: f32[64,64], index: 4, kind: input, shape index: {}]
  %s5 = inlined_call_operand.hbm [shape: f32[64,64], index: 5, kind: input, shape index: {}]
  %s6 = inlined_call_operand.vmem [shape: f32[1,64], index: 6, kind: input, shape index: {}]
  %s7 = inlined_call_operand.hbm [shape: f32[1,64], index: 7, kind: input, shape index: {}]
  %s8 = inlined_call_operand.hbm [shape: f32[1,64], index: 8, kind: input, shape index: {}]
  %s9 = inlined_call_operand.vmem [shape: f32[16,64], index: 9, kind: output, shape index: {0}]
  %s10 = inlined_call_operand.vmem [shape: f32[16,64], index: 10, kind: output, shape index: {1}]
  %s11 = inlined_call_operand.vmem [shape: f32[16,64], index: 11, kind: output, shape index: {2}]
  %12 = xla_tuple %s9, %s10, %s11
  %s13 = sld [smem:[#allocation0]]
  $region82: #{multi_headed_attention.3} parent=0
    _
  %s15 = ssub.s32 1, %s13
  %s16 = scalar_select 0, %s15, %s13
  $region1: #{multi_headed_attention.3} parent=0
    #allocation2 [shape = 'u8[32768]{0}', space=vmem, size = 0x8000, scoped, tag = 'input window, operand 3, single buffered']
    #allocation3 [shape = 's32[1]{0}', space=sflag, size = 0x4, scoped, tag = 'scoped memory for multi_headed_attention.3']
    #allocation4 [shape = 'u8[32768]{0}', space=vmem, size = 0x8000, scoped, tag = 'input window, operand 4, single buffered']
    #allocation5 [shape = 's32[1]{0}', space=sflag, size = 0x4, scoped, tag = 'scoped memory for multi_headed_attention.3']
    #allocation6 [shape = 'u8[32768]{0}', space=vmem, size = 0x8000, scoped, tag = 'input window, operand 5, single buffered']
    #allocation7 [shape = 'u8[512]{0}', space=vmem, size = 0x400, scoped, tag = 'input window, operand 7, single buffered']
    #allocation8 [shape = 's32[1]{0}', space=sflag, size = 0x4, scoped, tag = 'scoped memory for multi_headed_attention.3']
    #allocation9 [shape = 'u8[512]{0}', space=vmem, size = 0x400, scoped, tag = 'input window, operand 8, single buffered']
    %17 = vsyncpa [#allocation3], 0
    %18 = vsyncpa [#allocation5], 0
    %19 = vsyncpa [#allocation8], 0
    // Predicated region
    $region2: #{multi_headed_attention.3} parent=1 // pred_check
      _
    $region3: #{multi_headed_attention.3} parent=1 // pred_check_branch
      %21 = sbr.rel (0) target = $region5
    $region4: #{multi_headed_attention.3} parent=1 // pred_region
      _
    $region5: #{multi_headed_attention.3} parent=1 // pred_fallthru
      _
    // Predicated region
    $region6: #{multi_headed_attention.3} parent=1 // pred_check
      _
    $region7: #{multi_headed_attention.3} parent=1 // pred_check_branch
      %23 = sbr.rel (0) target = $region9
    $region8: #{multi_headed_attention.3} parent=1 // pred_region
      _
    $region9: #{multi_headed_attention.3} parent=1 // pred_fallthru
      _
    // Predicated region
    $region10: #{multi_headed_attention.3} parent=1 // pred_check
      _
    $region11: #{multi_headed_attention.3} parent=1 // pred_check_branch
      %25 = sbr.rel (0) target = $region13
    $region12: #{multi_headed_attention.3} parent=1 // pred_region
      _
    $region13: #{multi_headed_attention.3} parent=1 // pred_fallthru
      _
    // Predicated region
    $region14: #{multi_headed_attention.3} parent=1 // pred_check
      _
    $region15: #{multi_headed_attention.3} parent=1 // pred_check_branch
      %27 = sbr.rel (0) target = $region17
    $region16: #{multi_headed_attention.3} parent=1 // pred_region
      %s29 = ssub.s32 1024, 1024
      %30 = vsyncadd [#allocation3], %s29
      %s31 = sshll.u32 [#allocation2], 4
      %s32 = int_to_ptr.vmem [resolvable:$true] %s31
      %37 = dma.hbm_to_vmem [thread:$0]  %s3, 1024, %s32, [#allocation3], 128, 128, 8
    $region17: #{multi_headed_attention.3} parent=1 // pred_fallthru
      _
    // Predicated region
    $region18: #{multi_headed_attention.3} parent=1 // pred_check
      _
    $region19: #{multi_headed_attention.3} parent=1 // pred_check_branch
      %39 = sbr.rel (0) target = $region21
    $region20: #{multi_headed_attention.3} parent=1 // pred_region
      %s41 = ssub.s32 1024, 1024
      %42 = vsyncadd [#allocation5], %s41
      %s43 = sshll.u32 [#allocation4], 4
      %s44 = int_to_ptr.vmem [resolvable:$true] %s43
      %49 = dma.hbm_to_vmem [thread:$0]  %s4, 1024, %s44, [#allocation5], 128, 128, 8
    $region21: #{multi_headed_attention.3} parent=1 // pred_fallthru
      _
    // Predicated region
    $region22: #{multi_headed_attention.3} parent=1 // pred_check
      _
    $region23: #{multi_headed_attention.3} parent=1 // pred_check_branch
      %51 = sbr.rel (0) target = $region25
    $region24: #{multi_headed_attention.3} parent=1 // pred_region
      %s53 = ssub.s32 1024, 1024
      %54 = vsyncadd [#allocation5], %s53
      %s55 = sshll.u32 [#allocation6], 4
      %s56 = int_to_ptr.vmem [resolvable:$true] %s55
      %61 = dma.hbm_to_vmem [thread:$0]  %s5, 1024, %s56, [#allocation5], 128, 128, 8
    $region25: #{multi_headed_attention.3} parent=1 // pred_fallthru
      _
    // Predicated region
    $region26: #{multi_headed_attention.3} parent=1 // pred_check
      _
    $region27: #{multi_headed_attention.3} parent=1 // pred_check_branch
      %63 = sbr.rel (0) target = $region29
    $region28: #{multi_headed_attention.3} parent=1 // pred_region
      _
    $region29: #{multi_headed_attention.3} parent=1 // pred_fallthru
      _
    // Predicated region
    $region30: #{multi_headed_attention.3} parent=1 // pred_check
      _
    $region31: #{multi_headed_attention.3} parent=1 // pred_check_branch
      %65 = sbr.rel (0) target = $region33
    $region32: #{multi_headed_attention.3} parent=1 // pred_region
      %s67 = ssub.s32 16, 16
      %68 = vsyncadd [#allocation8], %s67
      %s70 = sshll.u32 [#allocation7], 4
      %s71 = int_to_ptr.vmem [resolvable:$true] %s70
      %73 = dma.hbm_to_vmem [thread:$0]  %s7, 16, %s71, [#allocation8]
    $region33: #{multi_headed_attention.3} parent=1 // pred_fallthru
      _
    // Predicated region
    $region34: #{multi_headed_attention.3} parent=1 // pred_check
      _
    $region35: #{multi_headed_attention.3} parent=1 // pred_check_branch
      %75 = sbr.rel (0) target = $region37
    $region36: #{multi_headed_attention.3} parent=1 // pred_region
      %s77 = ssub.s32 16, 16
      %78 = vsyncadd [#allocation8], %s77
      %s80 = sshll.u32 [#allocation9], 4
      %s81 = int_to_ptr.vmem [resolvable:$true] %s80
      %83 = dma.hbm_to_vmem [thread:$0]  %s8, 16, %s81, [#allocation8]
    $region37: #{multi_headed_attention.3} parent=1 // pred_fallthru
      _
    // Predicated region
    $region38: #{multi_headed_attention.3} parent=1 // pred_check
      _
    $region39: #{multi_headed_attention.3} parent=1 // pred_check_branch
      %85 = sbr.rel (0) target = $region41
    $region40: #{multi_headed_attention.3} parent=1 // pred_region
      %86 = dma.done [#allocation3], 1024
    $region41: #{multi_headed_attention.3} parent=1 // pred_fallthru
      _
    // Predicated region
    $region42: #{multi_headed_attention.3} parent=1 // pred_check
      _
    $region43: #{multi_headed_attention.3} parent=1 // pred_check_branch
      %88 = sbr.rel (0) target = $region45
    $region44: #{multi_headed_attention.3} parent=1 // pred_region
      %89 = dma.done [#allocation5], 1024
    $region45: #{multi_headed_attention.3} parent=1 // pred_fallthru
      _
    // Predicated region
    $region46: #{multi_headed_attention.3} parent=1 // pred_check
      _
    $region47: #{multi_headed_attention.3} parent=1 // pred_check_branch
      %91 = sbr.rel (0) target = $region49
    $region48: #{multi_headed_attention.3} parent=1 // pred_region
      %92 = dma.done [#allocation5], 1024
    $region49: #{multi_headed_attention.3} parent=1 // pred_fallthru
      _
    // Predicated region
    $region50: #{multi_headed_attention.3} parent=1 // pred_check
      _
    $region51: #{multi_headed_attention.3} parent=1 // pred_check_branch
      %94 = sbr.rel (0) target = $region53
    $region52: #{multi_headed_attention.3} parent=1 // pred_region
      %95 = dma.done [#allocation8], 16
    $region53: #{multi_headed_attention.3} parent=1 // pred_fallthru
      _
    // Predicated region
    $region54: #{multi_headed_attention.3} parent=1 // pred_check
      _
    $region55: #{multi_headed_attention.3} parent=1 // pred_check_branch
      %97 = sbr.rel (0) target = $region57
    $region56: #{multi_headed_attention.3} parent=1 // pred_region
      %98 = dma.done [#allocation8], 16
    $region57: #{multi_headed_attention.3} parent=1 // pred_fallthru
      _
    %v99 = vld [vmem:[%s0] sm:$0xff]
    %v100 = vld [vmem:[%s0 + $0x8] sm:$0xff]
    %v101 = vld [vmem:[#allocation2] sm:$0xff]
    %v102 = vld [vmem:[#allocation2 + $0x8] sm:$0xff]
    %v103 = vld [vmem:[#allocation2 + $0x10] sm:$0xff]
    %v104 = vld [vmem:[#allocation2 + $0x18] sm:$0xff]
    %v105 = vld [vmem:[#allocation2 + $0x20] sm:$0xff]
    %v106 = vld [vmem:[#allocation2 + $0x28] sm:$0xff]
    %v107 = vld [vmem:[#allocation2 + $0x30] sm:$0xff]
    %v108 = vld [vmem:[#allocation2 + $0x38] sm:$0xff]
    %v109 = vld [vmem:[%s6] sm:$0x1]
    %v111 = vlaneseq
    %v112 = vshrl.u32 %v111, 7
    %v113 = vsub.s32 0, %v112
    %v114 = vrot.slane %v109, %v113
    %vm116 = vcmask 523264
    %v118 = vsel %vm116, %v99, 0
    %v121 = vsel %vm116, %v100, 0
    %123 = vmatprep.subr.mxu0 0.0
    %124 = vmatpush1.msra.mxu0 %v101
    %125 = vmatprep.subr.mxu0 0.0
    %126 = vmatpush1.msra.mxu0 %v102
    %127 = vmatprep.subr.mxu0 0.0
    %128 = vmatpush1.msra.mxu0 %v103
    %129 = vmatprep.subr.mxu0 0.0
    %130 = vmatpush1.msra.mxu0 %v104
    %131 = vmatprep.subr.mxu0 0.0
    %132 = vmatpush1.msra.mxu0 %v105
    %133 = vmatprep.subr.mxu0 0.0
    %134 = vmatpush1.msra.mxu0 %v106
    %135 = vmatprep.subr.mxu0 0.0
    %136 = vmatpush1.msra.mxu0 %v107
    %137 = vmatprep.subr.mxu0 0.0
    %138 = vmatpush1.msra.mxu0 %v108
    %139 = vmatprep.subr.mxu0 0.0
    %140 = vmatpush1.msra.mxu0 0.0
    %141 = vmatprep.subr.mxu0 0.0
    %142 = vmatpush1.msra.mxu0 0.0
    %143 = vmatprep.subr.mxu0 0.0
    %144 = vmatpush1.msra.mxu0 0.0
    %145 = vmatprep.subr.mxu0 0.0
    %146 = vmatpush1.msra.mxu0 0.0
    %147 = vmatprep.subr.mxu0 0.0
    %148 = vmatpush1.msra.mxu0 0.0
    %149 = vmatprep.subr.mxu0 0.0
    %150 = vmatpush1.msra.mxu0 0.0
    %151 = vmatprep.subr.mxu0 0.0
    %152 = vmatpush1.msra.mxu0 0.0
    %153 = vmatprep.subr.mxu0 0.0
    %154 = vmatpush1.msra.mxu0 0.0
    %155 = vmatprep.subr.mxu0 0.0
    %156 = vmatpush1.msra.mxu0 0.0
    %157 = vmatprep.subr.mxu0 0.0
    %158 = vmatpush1.msra.mxu0 0.0
    %159 = vmatprep.subr.mxu0 0.0
    %160 = vmatpush1.msra.mxu0 0.0
    %161 = vmatprep.subr.mxu0 0.0
    %162 = vmatpush1.msra.mxu0 0.0
    %163 = vmatprep.subr.mxu0 0.0
    %164 = vmatpush1.msra.mxu0 0.0
    %165 = vmatprep.subr.mxu0 0.0
    %166 = vmatpush1.msra.mxu0 0.0
    %167 = vmatprep.subr.mxu0 0.0
    %168 = vmatpush1.msra.mxu0 0.0
    %169 = vmatprep.subr.mxu0 0.0
    %170 = vmatpush1.msra.mxu0 0.0
    %171 = vmatprep.subr.mxu0 0.0
    %172 = vmatpush1.msra.mxu0 0.0
    %173 = vmatprep.subr.mxu0 0.0
    %174 = vmatpush1.msra.mxu0 0.0
    %175 = vmatprep.subr.mxu0 0.0
    %176 = vmatpush1.msra.mxu0 0.0
    %177 = vmatprep.subr.mxu0 0.0
    %178 = vmatpush1.msra.mxu0 0.0
    %179 = vmatprep.subr.mxu0 0.0
    %180 = vmatpush1.msra.mxu0 0.0
    %181 = vmatprep.subr.mxu0 0.0
    %182 = vmatpush1.msra.mxu0 0.0
    %183 = vmatprep.subr.mxu0 0.0
    %184 = vmatpush1.msra.mxu0 0.0
    %185 = vmatprep.subr.mxu0 0.0
    %186 = vmatpush1.msra.mxu0 0.0
    %187 = vmatprep.mubr.f32.mxu0 0.0
    %188 = vmatmul.mubr.f32.gmra.mrb[0].mxu0 %v118
    %v189 = vpop.f32.mrb[0].mxu0
    %v190 = vadd.f32 %v114, %v189
    %v191 = vpop.f32.mrb[0].mxu0
    %192 = vmatprep.mubr.f32.mxu0 0.0
    %193 = vmatmul.mubr.f32.gmra.mrb[0].mxu0 %v121
    %v194 = vpop.f32.mrb[0].mxu0
    %v195 = vadd.f32 %v114, %v194
    %v196 = vpop.f32.mrb[0].mxu0
    %197 = vdwg.mxu0
    %198 = vst.msk [vmem:[%s9] sm:$0xff] %vm116, %v190
    %199 = vst.msk [vmem:[%s9 + $0x8] sm:$0xff] %vm116, %v195
    %v200 = vld [vmem:[%s1] sm:$0xff]
    %v201 = vld [vmem:[%s1 + $0x8] sm:$0xff]
    %v202 = vld [vmem:[#allocation4] sm:$0xff]
    %v203 = vld [vmem:[#allocation4 + $0x8] sm:$0xff]
    %v204 = vld [vmem:[#allocation4 + $0x10] sm:$0xff]
    %v205 = vld [vmem:[#allocation4 + $0x18] sm:$0xff]
    %v206 = vld [vmem:[#allocation4 + $0x20] sm:$0xff]
    %v207 = vld [vmem:[#allocation4 + $0x28] sm:$0xff]
    %v208 = vld [vmem:[#allocation4 + $0x30] sm:$0xff]
    %v209 = vld [vmem:[#allocation4 + $0x38] sm:$0xff]
    %v210 = vld [vmem:[#allocation7] sm:$0x1]
    %v212 = vlaneseq
    %v213 = vshrl.u32 %v212, 7
    %v214 = vsub.s32 0, %v213
    %v215 = vrot.slane %v210, %v214
    %v218 = vsel %vm116, %v200, 0
    %v221 = vsel %vm116, %v201, 0
    %223 = vmatprep.subr.mxu0 0.0
    %224 = vmatpush1.msra.mxu0 %v202
    %225 = vmatprep.subr.mxu0 0.0
    %226 = vmatpush1.msra.mxu0 %v203
    %227 = vmatprep.subr.mxu0 0.0
    %228 = vmatpush1.msra.mxu0 %v204
    %229 = vmatprep.subr.mxu0 0.0
    %230 = vmatpush1.msra.mxu0 %v205
    %231 = vmatprep.subr.mxu0 0.0
    %232 = vmatpush1.msra.mxu0 %v206
    %233 = vmatprep.subr.mxu0 0.0
    %234 = vmatpush1.msra.mxu0 %v207
    %235 = vmatprep.subr.mxu0 0.0
    %236 = vmatpush1.msra.mxu0 %v208
    %237 = vmatprep.subr.mxu0 0.0
    %238 = vmatpush1.msra.mxu0 %v209
    %239 = vmatprep.subr.mxu0 0.0
    %240 = vmatpush1.msra.mxu0 0.0
    %241 = vmatprep.subr.mxu0 0.0
    %242 = vmatpush1.msra.mxu0 0.0
    %243 = vmatprep.subr.mxu0 0.0
    %244 = vmatpush1.msra.mxu0 0.0
    %245 = vmatprep.subr.mxu0 0.0
    %246 = vmatpush1.msra.mxu0 0.0
    %247 = vmatprep.subr.mxu0 0.0
    %248 = vmatpush1.msra.mxu0 0.0
    %249 = vmatprep.subr.mxu0 0.0
    %250 = vmatpush1.msra.mxu0 0.0
    %251 = vmatprep.subr.mxu0 0.0
    %252 = vmatpush1.msra.mxu0 0.0
    %253 = vmatprep.subr.mxu0 0.0
    %254 = vmatpush1.msra.mxu0 0.0
    %255 = vmatprep.subr.mxu0 0.0
    %256 = vmatpush1.msra.mxu0 0.0
    %257 = vmatprep.subr.mxu0 0.0
    %258 = vmatpush1.msra.mxu0 0.0
    %259 = vmatprep.subr.mxu0 0.0
    %260 = vmatpush1.msra.mxu0 0.0
    %261 = vmatprep.subr.mxu0 0.0
    %262 = vmatpush1.msra.mxu0 0.0
    %263 = vmatprep.subr.mxu0 0.0
    %264 = vmatpush1.msra.mxu0 0.0
    %265 = vmatprep.subr.mxu0 0.0
    %266 = vmatpush1.msra.mxu0 0.0
    %267 = vmatprep.subr.mxu0 0.0
    %268 = vmatpush1.msra.mxu0 0.0
    %269 = vmatprep.subr.mxu0 0.0
    %270 = vmatpush1.msra.mxu0 0.0
    %271 = vmatprep.subr.mxu0 0.0
    %272 = vmatpush1.msra.mxu0 0.0
    %273 = vmatprep.subr.mxu0 0.0
    %274 = vmatpush1.msra.mxu0 0.0
    %275 = vmatprep.subr.mxu0 0.0
    %276 = vmatpush1.msra.mxu0 0.0
    %277 = vmatprep.subr.mxu0 0.0
    %278 = vmatpush1.msra.mxu0 0.0
    %279 = vmatprep.subr.mxu0 0.0
    %280 = vmatpush1.msra.mxu0 0.0
    %281 = vmatprep.subr.mxu0 0.0
    %282 = vmatpush1.msra.mxu0 0.0
    %283 = vmatprep.subr.mxu0 0.0
    %284 = vmatpush1.msra.mxu0 0.0
    %285 = vmatprep.subr.mxu0 0.0
    %286 = vmatpush1.msra.mxu0 0.0
    %287 = vmatprep.mubr.f32.mxu0 0.0
    %288 = vmatmul.mubr.f32.gmra.mrb[0].mxu0 %v218
    %v289 = vpop.f32.mrb[0].mxu0
    %v290 = vadd.f32 %v215, %v289
    %v291 = vpop.f32.mrb[0].mxu0
    %292 = vmatprep.mubr.f32.mxu0 0.0
    %293 = vmatmul.mubr.f32.gmra.mrb[0].mxu0 %v221
    %v294 = vpop.f32.mrb[0].mxu0
    %v295 = vadd.f32 %v215, %v294
    %v296 = vpop.f32.mrb[0].mxu0
    %297 = vdwg.mxu0
    %298 = vst.msk [vmem:[%s10] sm:$0xff] %vm116, %v290
    %299 = vst.msk [vmem:[%s10 + $0x8] sm:$0xff] %vm116, %v295
    %v300 = vld [vmem:[%s2] sm:$0xff]
    %v301 = vld [vmem:[%s2 + $0x8] sm:$0xff]
    %v302 = vld [vmem:[#allocation6] sm:$0xff]
    %v303 = vld [vmem:[#allocation6 + $0x8] sm:$0xff]
    %v304 = vld [vmem:[#allocation6 + $0x10] sm:$0xff]
    %v305 = vld [vmem:[#allocation6 + $0x18] sm:$0xff]
    %v306 = vld [vmem:[#allocation6 + $0x20] sm:$0xff]
    %v307 = vld [vmem:[#allocation6 + $0x28] sm:$0xff]
    %v308 = vld [vmem:[#allocation6 + $0x30] sm:$0xff]
    %v309 = vld [vmem:[#allocation6 + $0x38] sm:$0xff]
    %v310 = vld [vmem:[#allocation9] sm:$0x1]
    %v312 = vlaneseq
    %v313 = vshrl.u32 %v312, 7
    %v314 = vsub.s32 0, %v313
    %v315 = vrot.slane %v310, %v314
    %v318 = vsel %vm116, %v300, 0
    %v321 = vsel %vm116, %v301, 0
    %323 = vmatprep.subr.mxu0 0.0
    %324 = vmatpush1.msra.mxu0 %v302
    %325 = vmatprep.subr.mxu0 0.0
    %326 = vmatpush1.msra.mxu0 %v303
    %327 = vmatprep.subr.mxu0 0.0
    %328 = vmatpush1.msra.mxu0 %v304
    %329 = vmatprep.subr.mxu0 0.0
    %330 = vmatpush1.msra.mxu0 %v305
    %331 = vmatprep.subr.mxu0 0.0
    %332 = vmatpush1.msra.mxu0 %v306
    %333 = vmatprep.subr.mxu0 0.0
    %334 = vmatpush1.msra.mxu0 %v307
    %335 = vmatprep.subr.mxu0 0.0
    %336 = vmatpush1.msra.mxu0 %v308
    %337 = vmatprep.subr.mxu0 0.0
    %338 = vmatpush1.msra.mxu0 %v309
    %339 = vmatprep.subr.mxu0 0.0
    %340 = vmatpush1.msra.mxu0 0.0
    %341 = vmatprep.subr.mxu0 0.0
    %342 = vmatpush1.msra.mxu0 0.0
    %343 = vmatprep.subr.mxu0 0.0
    %344 = vmatpush1.msra.mxu0 0.0
    %345 = vmatprep.subr.mxu0 0.0
    %346 = vmatpush1.msra.mxu0 0.0
    %347 = vmatprep.subr.mxu0 0.0
    %348 = vmatpush1.msra.mxu0 0.0
    %349 = vmatprep.subr.mxu0 0.0
    %350 = vmatpush1.msra.mxu0 0.0
    %351 = vmatprep.subr.mxu0 0.0
    %352 = vmatpush1.msra.mxu0 0.0
    %353 = vmatprep.subr.mxu0 0.0
    %354 = vmatpush1.msra.mxu0 0.0
    %355 = vmatprep.subr.mxu0 0.0
    %356 = vmatpush1.msra.mxu0 0.0
    %357 = vmatprep.subr.mxu0 0.0
    %358 = vmatpush1.msra.mxu0 0.0
    %359 = vmatprep.subr.mxu0 0.0
    %360 = vmatpush1.msra.mxu0 0.0
    %361 = vmatprep.subr.mxu0 0.0
    %362 = vmatpush1.msra.mxu0 0.0
    %363 = vmatprep.subr.mxu0 0.0
    %364 = vmatpush1.msra.mxu0 0.0
    %365 = vmatprep.subr.mxu0 0.0
    %366 = vmatpush1.msra.mxu0 0.0
    %367 = vmatprep.subr.mxu0 0.0
    %368 = vmatpush1.msra.mxu0 0.0
    %369 = vmatprep.subr.mxu0 0.0
    %370 = vmatpush1.msra.mxu0 0.0
    %371 = vmatprep.subr.mxu0 0.0
    %372 = vmatpush1.msra.mxu0 0.0
    %373 = vmatprep.subr.mxu0 0.0
    %374 = vmatpush1.msra.mxu0 0.0
    %375 = vmatprep.subr.mxu0 0.0
    %376 = vmatpush1.msra.mxu0 0.0
    %377 = vmatprep.subr.mxu0 0.0
    %378 = vmatpush1.msra.mxu0 0.0
    %379 = vmatprep.subr.mxu0 0.0
    %380 = vmatpush1.msra.mxu0 0.0
    %381 = vmatprep.subr.mxu0 0.0
    %382 = vmatpush1.msra.mxu0 0.0
    %383 = vmatprep.subr.mxu0 0.0
    %384 = vmatpush1.msra.mxu0 0.0
    %385 = vmatprep.subr.mxu0 0.0
    %386 = vmatpush1.msra.mxu0 0.0
    %387 = vmatprep.mubr.f32.mxu0 0.0
    %388 = vmatmul.mubr.f32.gmra.mrb[0].mxu0 %v318
    %v389 = vpop.f32.mrb[0].mxu0
    %v390 = vadd.f32 %v315, %v389
    %v391 = vpop.f32.mrb[0].mxu0
    %392 = vmatprep.mubr.f32.mxu0 0.0
    %393 = vmatmul.mubr.f32.gmra.mrb[0].mxu0 %v321
    %v394 = vpop.f32.mrb[0].mxu0
    %v395 = vadd.f32 %v315, %v394
    %v396 = vpop.f32.mrb[0].mxu0
    %397 = vdwg.mxu0
    %398 = vst.msk [vmem:[%s11] sm:$0xff] %vm116, %v390
    %399 = vst.msk [vmem:[%s11 + $0x8] sm:$0xff] %vm116, %v395
    // Predicated region
    $region58: #{multi_headed_attention.3} parent=1 // pred_check
      _
    $region59: #{multi_headed_attention.3} parent=1 // pred_check_branch
      %401 = sbr.rel (0) target = $region61
    $region60: #{multi_headed_attention.3} parent=1 // pred_region
      _
    $region61: #{multi_headed_attention.3} parent=1 // pred_fallthru
      _
    // Predicated region
    $region62: #{multi_headed_attention.3} parent=1 // pred_check
      _
    $region63: #{multi_headed_attention.3} parent=1 // pred_check_branch
      %403 = sbr.rel (0) target = $region65
    $region64: #{multi_headed_attention.3} parent=1 // pred_region
      _
    $region65: #{multi_headed_attention.3} parent=1 // pred_fallthru
      _
    // Predicated region
    $region66: #{multi_headed_attention.3} parent=1 // pred_check
      _
    $region67: #{multi_headed_attention.3} parent=1 // pred_check_branch
      %405 = sbr.rel (0) target = $region69
    $region68: #{multi_headed_attention.3} parent=1 // pred_region
      _
    $region69: #{multi_headed_attention.3} parent=1 // pred_fallthru
      _
    // Predicated region
    $region70: #{multi_headed_attention.3} parent=1 // pred_check
      _
    $region71: #{multi_headed_attention.3} parent=1 // pred_check_branch
      %407 = sbr.rel (0) target = $region73
    $region72: #{multi_headed_attention.3} parent=1 // pred_region
      _
    $region73: #{multi_headed_attention.3} parent=1 // pred_fallthru
      _
    // Predicated region
    $region74: #{multi_headed_attention.3} parent=1 // pred_check
      _
    $region75: #{multi_headed_attention.3} parent=1 // pred_check_branch
      %409 = sbr.rel (0) target = $region77
    $region76: #{multi_headed_attention.3} parent=1 // pred_region
      _
    $region77: #{multi_headed_attention.3} parent=1 // pred_fallthru
      _
    // Predicated region
    $region78: #{multi_headed_attention.3} parent=1 // pred_check
      _
    $region79: #{multi_headed_attention.3} parent=1 // pred_check_branch
      %411 = sbr.rel (0) target = $region81
    $region80: #{multi_headed_attention.3} parent=1 // pred_region
      _
    $region81: #{multi_headed_attention.3} parent=1 // pred_fallthru
      _
    %412 = vsyncpa [#allocation3], 1
    %413 = vsyncpa [#allocation5], 1
    %414 = vsyncpa [#allocation8], 1

// kernel: multi_headed_attention.4
$region0: #{multi_headed_attention.4}
  #allocation0 [shape = 'u32[]', space=smem, size = 0x4, offset = 0x4, fixed_abs, tag = 'smem constant byte address 0x4 - core index']
  #allocation1 [shape = 'u32[144,128]{1,0:T(1,128)}', space=vmem, size = 0x12000, scoped, tag = 'internal scratch']
  %s0 = inlined_call_operand.vmem [shape: f32[2,2,8,32], index: 0, kind: input, shape index: {}]
  %s1 = inlined_call_operand.vmem [shape: f32[2,2,8,32], index: 1, kind: input, shape index: {}]
  %s2 = inlined_call_operand.vmem [shape: f32[2,2,8,32], index: 2, kind: input, shape index: {}]
  %s3 = inlined_call_operand.vmem [shape: f32[2,2,8,32], index: 3, kind: output, shape index: {}]
  %s4 = sld [smem:[#allocation0]]
  $region193: #{multi_headed_attention.4} parent=0
    _
  %s6 = ssub.s32 1, %s4
  %s7 = scalar_select 0, %s6, %s4
  $region1: #{multi_headed_attention.4} parent=0
    #allocation2 [shape = 'u8[16384]{0}', space=vmem, size = 0x4000, scoped, tag = 'input window, operand 0']
    #allocation3 [shape = 'u8[16384]{0}', space=vmem, size = 0x4000, scoped, tag = 'input window, operand 1']
    #allocation4 [shape = 'u8[16384]{0}', space=vmem, size = 0x4000, scoped, tag = 'input window, operand 2']
    #allocation5 [shape = 'u8[16384]{0}', space=vmem, size = 0x4000, scoped, tag = 'output window, operand 0']
    loop: start=0, step=1, limit=4
    $region2: #{multi_headed_attention.4} parent=1 // loop_pre_header
      _
    $region3: #{multi_headed_attention.4} parent=1 // loop_header
      %s9 = sphi 0, %s13
      %p10 = scmp.ge.s32.totalorder %s9, 4
      %s16 = sphi 0, %s28
      %s17 = sphi 0, %s24
      %s18 = sphi 0, %s16
      %s19 = sphi 0, %s17
      %s20 = sphi 0, %s18
      %s21 = sphi 0, %s19
      %s33 = sphi 0, %s35
      %s36 = sphi 0, %s33
      %s37 = sphi 0, %s36
      %s53 = sphi 0, %s37
      %s61 = sphi 0, %s63
      %s64 = sphi 0, %s61
      %s65 = sphi 0, %s64
      %s81 = sphi 0, %s65
      %s89 = sphi 0, %s91
      %s92 = sphi 0, %s89
      %s93 = sphi 0, %s92
      %s109 = sphi 0, %s93
      %s117 = sphi 0, %s119
      %s120 = sphi 0, %s117
      %s121 = sphi 0, %s120
      %s137 = sphi 0, %s121
    $region4: #{multi_headed_attention.4} parent=1 // loop_header_branch
      %12 = sbr.rel (%p10) target = $region8
    $region5: #{multi_headed_attention.4} parent=1 // loop_body
      %s14 = ssub.s32 %s9, 1
      %s15 = ssub.s32 %s9, 2
      %s22 = sadd.s32 1, %s17
      %p23 = scmp.ge.s32.totalorder %s22, 2
      %s24 = scalar_select %p23, 0, %s22
      %s25 = sadd.s32 1, %s16
      %s26 = scalar_select %p23, %s25, %s16
      %p27 = scmp.ge.s32.totalorder %s26, 1
      %s28 = scalar_select %p27, 0, %s26
      %s29 = ssub.s32 %s16, %s28
      %s30 = ssub.s32 %s17, %s24
      %s31 = sor.u32 %s29, %s30
      %p32 = scmp.eq.s32.totalorder %s31, 0
      %s34 = sadd.s32 %s33, 1
      %s35 = scalar_select %p32, %s33, %s34
      %p38 = pneg %p32
      %p39 = scmp.eq.s32.totalorder %s9, 1
      %p40 = por %p38, %p39
      %p41 = scmp.ne.s32.totalorder %s33, %s36
      %p42 = scmp.eq.s32.totalorder %s9, 0
      %p43 = por %p41, %p42
      %p44 = scmp.ne.s32.totalorder %s33, %s36
      %p45 = scmp.eq.s32.totalorder %s14, 1
      %p46 = por %p44, %p45
      %p47 = scmp.ne.s32.totalorder %s36, %s37
      %p48 = scmp.eq.s32.totalorder %s14, 0
      %p49 = por %p47, %p48
      %p50 = scmp.ne.s32.totalorder %s36, %s37
      %p51 = scmp.eq.s32.totalorder %s15, 1
      %p52 = por %p50, %p51
      %p54 = scmp.ne.s32.totalorder %s37, %s53
      %p55 = scmp.eq.s32.totalorder %s15, 0
      %p56 = por %p54, %p55
      %s57 = ssub.s32 %s16, %s28
      %s58 = ssub.s32 %s17, %s24
      %s59 = sor.u32 %s57, %s58
      %p60 = scmp.eq.s32.totalorder %s59, 0
      %s62 = sadd.s32 %s61, 1
      %s63 = scalar_select %p60, %s61, %s62
      %p66 = pneg %p60
      %p67 = scmp.eq.s32.totalorder %s9, 1
      %p68 = por %p66, %p67
      %p69 = scmp.ne.s32.totalorder %s61, %s64
      %p70 = scmp.eq.s32.totalorder %s9, 0
      %p71 = por %p69, %p70
      %p72 = scmp.ne.s32.totalorder %s61, %s64
      %p73 = scmp.eq.s32.totalorder %s14, 1
      %p74 = por %p72, %p73
      %p75 = scmp.ne.s32.totalorder %s64, %s65
      %p76 = scmp.eq.s32.totalorder %s14, 0
      %p77 = por %p75, %p76
      %p78 = scmp.ne.s32.totalorder %s64, %s65
      %p79 = scmp.eq.s32.totalorder %s15, 1
      %p80 = por %p78, %p79
      %p82 = scmp.ne.s32.totalorder %s65, %s81
      %p83 = scmp.eq.s32.totalorder %s15, 0
      %p84 = por %p82, %p83
      %s85 = ssub.s32 %s16, %s28
      %s86 = ssub.s32 %s17, %s24
      %s87 = sor.u32 %s85, %s86
      %p88 = scmp.eq.s32.totalorder %s87, 0
      %s90 = sadd.s32 %s89, 1
      %s91 = scalar_select %p88, %s89, %s90
      %p94 = pneg %p88
      %p95 = scmp.eq.s32.totalorder %s9, 1
      %p96 = por %p94, %p95
      %p97 = scmp.ne.s32.totalorder %s89, %s92
      %p98 = scmp.eq.s32.totalorder %s9, 0
      %p99 = por %p97, %p98
      %p100 = scmp.ne.s32.totalorder %s89, %s92
      %p101 = scmp.eq.s32.totalorder %s14, 1
      %p102 = por %p100, %p101
      %p103 = scmp.ne.s32.totalorder %s92, %s93
      %p104 = scmp.eq.s32.totalorder %s14, 0
      %p105 = por %p103, %p104
      %p106 = scmp.ne.s32.totalorder %s92, %s93
      %p107 = scmp.eq.s32.totalorder %s15, 1
      %p108 = por %p106, %p107
      %p110 = scmp.ne.s32.totalorder %s93, %s109
      %p111 = scmp.eq.s32.totalorder %s15, 0
      %p112 = por %p110, %p111
      %s113 = ssub.s32 %s16, %s28
      %s114 = ssub.s32 %s17, %s24
      %s115 = sor.u32 %s113, %s114
      %p116 = scmp.eq.s32.totalorder %s115, 0
      %s118 = sadd.s32 %s117, 1
      %s119 = scalar_select %p116, %s117, %s118
      %p122 = pneg %p116
      %p123 = scmp.eq.s32.totalorder %s9, 1
      %p124 = por %p122, %p123
      %p125 = scmp.ne.s32.totalorder %s117, %s120
      %p126 = scmp.eq.s32.totalorder %s9, 0
      %p127 = por %p125, %p126
      %p128 = scmp.ne.s32.totalorder %s117, %s120
      %p129 = scmp.eq.s32.totalorder %s14, 1
      %p130 = por %p128, %p129
      %p131 = scmp.ne.s32.totalorder %s120, %s121
      %p132 = scmp.eq.s32.totalorder %s14, 0
      %p133 = por %p131, %p132
      %p134 = scmp.ne.s32.totalorder %s120, %s121
      %p135 = scmp.eq.s32.totalorder %s15, 1
      %p136 = por %p134, %p135
      %p138 = scmp.ne.s32.totalorder %s121, %s137
      %p139 = scmp.eq.s32.totalorder %s15, 0
      %p140 = por %p138, %p139
      %p141 = scmp.le.s32.totalorder 1, %s9
      %p142 = scmp.lt.s32.totalorder %s9, 3
      %p143 = pnand %p141, %p142
      %p144 = pneg %p143
      // Predicated region
      $region9: #{multi_headed_attention.4} parent=5 // pred_check
        _
      $region10: #{multi_headed_attention.4} parent=5 // pred_check_branch
        %146 = sbr.rel (%p143) target = $region12
      $region11: #{multi_headed_attention.4} parent=5 // pred_region
        %s147 = ssub.s32 %s9, 1
      $region12: #{multi_headed_attention.4} parent=5 // pred_fallthru
        _
      %p148 = scmp.lt.s32.totalorder %s9, 2
      // Predicated region
      $region13: #{multi_headed_attention.4} parent=5 // pred_check
        %p149 = pneg %p148
      $region14: #{multi_headed_attention.4} parent=5 // pred_check_branch
        %151 = sbr.rel (%p149) target = $region16
      $region15: #{multi_headed_attention.4} parent=5 // pred_region
        // Predicated region
        $region17: #{multi_headed_attention.4} parent=15 // pred_check
          %p152 = pneg %p43
        $region18: #{multi_headed_attention.4} parent=15 // pred_check_branch
          %154 = sbr.rel (%p152) target = $region20
        $region19: #{multi_headed_attention.4} parent=15 // pred_region
          %s155 = sand.u32 %s33, 1
          %s156 = sand.u32 %s33, 1
          %s157 = smul.addr %s156, 16
          %s158 = scalar_lea.vmem [#allocation2], %s157
          %s159 = smul.u32 2, %s16
          %s160 = smul.addr %s159, 2
          %s161 = sadd.s32 %s17, %s160
          %s162 = smul.addr %s161, 8
          %s163 = scalar_lea.vmem %s0, %s162
          // Predicated region
          $region21: #{multi_headed_attention.4} parent=19 // pred_check
            _
          $region22: #{multi_headed_attention.4} parent=19 // pred_check_branch
            %165 = sbr.rel (0) target = $region24
          $region23: #{multi_headed_attention.4} parent=19 // pred_region
            // Predicated region
            $region25: #{multi_headed_attention.4} parent=23 // pred_check
              _
            $region26: #{multi_headed_attention.4} parent=23 // pred_check_branch
              %167 = sbr.rel (0) target = $region28
            $region27: #{multi_headed_attention.4} parent=23 // pred_region
              // Predicated region
              $region40: #{multi_headed_attention.4} parent=27 // pred_check
                _
              $region41: #{multi_headed_attention.4} parent=27 // pred_check_branch
                %184 = sbr.rel (0) target = $region43
              $region42: #{multi_headed_attention.4} parent=27 // pred_region
                loop: start=0, step=1, limit=1
                $region44: #{multi_headed_attention.4} parent=42 // loop_pre_header
                  _
                $region45: #{multi_headed_attention.4} parent=42 // loop_header
                  %s186 = sphi 0, %s190
                  %p187 = scmp.ge.s32.totalorder %s186, 1
                  %s191 = sphi %s163, %s163
                  %s192 = sphi %s158, %s158
                $region46: #{multi_headed_attention.4} parent=42 // loop_header_branch
                  %189 = sbr.rel (%p187) target = $region50
                $region47: #{multi_headed_attention.4} parent=42 // loop_body
                  %v193 = vld [vmem:[%s191] sm:$0xff]
                  %194 = vst [vmem:[%s192] sm:$0xff] %v193
                  %v195 = vld [vmem:[%s191 + $0x10] sm:$0xff]
                  %196 = vst [vmem:[%s192 + $0x8] sm:$0xff] %v195
                $region48: #{multi_headed_attention.4} parent=42 // loop_footer
                  %s190 = sadd.s32 1, %s186
                $region49: #{multi_headed_attention.4} parent=42 // loop_footer_branch
                  %185 = sbr.rel target = $region45
                $region50: #{multi_headed_attention.4} parent=42 // loop_exit
                  _
              $region43: #{multi_headed_attention.4} parent=27 // pred_fallthru
                _
              // Predicated region
              $region51: #{multi_headed_attention.4} parent=27 // pred_check
                _
              $region52: #{multi_headed_attention.4} parent=27 // pred_check_branch
                %198 = sbr.rel target = $region54
              $region53: #{multi_headed_attention.4} parent=27 // pred_region
                _
              $region54: #{multi_headed_attention.4} parent=27 // pred_fallthru
                _
            $region28: #{multi_headed_attention.4} parent=23 // pred_fallthru
              _
            // Predicated region
            $region29: #{multi_headed_attention.4} parent=23 // pred_check
              _
            $region30: #{multi_headed_attention.4} parent=23 // pred_check_branch
              %169 = sbr.rel target = $region32
            $region31: #{multi_headed_attention.4} parent=23 // pred_region
              loop: start=0, step=1, limit=1
              $region33: #{multi_headed_attention.4} parent=31 // loop_pre_header
                _
              $region34: #{multi_headed_attention.4} parent=31 // loop_header
                %s172 = sphi 0, %s176
                %p173 = scmp.ge.s32.totalorder %s172, 1
                %s177 = sphi %s163, %s163
                %s178 = sphi %s158, %s158
              $region35: #{multi_headed_attention.4} parent=31 // loop_header_branch
                %175 = sbr.rel (%p173) target = $region39
              $region36: #{multi_headed_attention.4} parent=31 // loop_body
                %v179 = vld [vmem:[%s177] sm:$0xff]
                %180 = vst [vmem:[%s178] sm:$0xff] %v179
                %v181 = vld [vmem:[%s177 + $0x10] sm:$0xff]
                %182 = vst [vmem:[%s178 + $0x8] sm:$0xff] %v181
              $region37: #{multi_headed_attention.4} parent=31 // loop_footer
                %s176 = sadd.s32 1, %s172
              $region38: #{multi_headed_attention.4} parent=31 // loop_footer_branch
                %171 = sbr.rel target = $region34
              $region39: #{multi_headed_attention.4} parent=31 // loop_exit
                _
            $region32: #{multi_headed_attention.4} parent=23 // pred_fallthru
              _
          $region24: #{multi_headed_attention.4} parent=19 // pred_fallthru
            _
          %199 = vnop
        $region20: #{multi_headed_attention.4} parent=15 // pred_fallthru
          _
        // Predicated region
        $region55: #{multi_headed_attention.4} parent=15 // pred_check
          %p200 = pneg %p71
        $region56: #{multi_headed_attention.4} parent=15 // pred_check_branch
          %202 = sbr.rel (%p200) target = $region58
        $region57: #{multi_headed_attention.4} parent=15 // pred_region
          %s203 = sand.u32 %s61, 1
          %s204 = sand.u32 %s61, 1
          %s205 = smul.addr %s204, 16
          %s206 = scalar_lea.vmem [#allocation3], %s205
          %s207 = smul.u32 2, %s16
          %s208 = smul.addr %s207, 2
          %s209 = sadd.s32 %s17, %s208
          %s210 = smul.addr %s209, 8
          %s211 = scalar_lea.vmem %s1, %s210
          // Predicated region
          $region59: #{multi_headed_attention.4} parent=57 // pred_check
            _
          $region60: #{multi_headed_attention.4} parent=57 // pred_check_branch
            %213 = sbr.rel (0) target = $region62
          $region61: #{multi_headed_attention.4} parent=57 // pred_region
            // Predicated region
            $region63: #{multi_headed_attention.4} parent=61 // pred_check
              _
            $region64: #{multi_headed_attention.4} parent=61 // pred_check_branch
              %215 = sbr.rel (0) target = $region66
            $region65: #{multi_headed_attention.4} parent=61 // pred_region
              // Predicated region
              $region78: #{multi_headed_attention.4} parent=65 // pred_check
                _
              $region79: #{multi_headed_attention.4} parent=65 // pred_check_branch
                %232 = sbr.rel (0) target = $region81
              $region80: #{multi_headed_attention.4} parent=65 // pred_region
                loop: start=0, step=1, limit=1
                $region82: #{multi_headed_attention.4} parent=80 // loop_pre_header
                  _
                $region83: #{multi_headed_attention.4} parent=80 // loop_header
                  %s234 = sphi 0, %s238
                  %p235 = scmp.ge.s32.totalorder %s234, 1
                  %s239 = sphi %s211, %s211
                  %s240 = sphi %s206, %s206
                $region84: #{multi_headed_attention.4} parent=80 // loop_header_branch
                  %237 = sbr.rel (%p235) target = $region88
                $region85: #{multi_headed_attention.4} parent=80 // loop_body
                  %v241 = vld [vmem:[%s239] sm:$0xff]
                  %242 = vst [vmem:[%s240] sm:$0xff] %v241
                  %v243 = vld [vmem:[%s239 + $0x10] sm:$0xff]
                  %244 = vst [vmem:[%s240 + $0x8] sm:$0xff] %v243
                $region86: #{multi_headed_attention.4} parent=80 // loop_footer
                  %s238 = sadd.s32 1, %s234
                $region87: #{multi_headed_attention.4} parent=80 // loop_footer_branch
                  %233 = sbr.rel target = $region83
                $region88: #{multi_headed_attention.4} parent=80 // loop_exit
                  _
              $region81: #{multi_headed_attention.4} parent=65 // pred_fallthru
                _
              // Predicated region
              $region89: #{multi_headed_attention.4} parent=65 // pred_check
                _
              $region90: #{multi_headed_attention.4} parent=65 // pred_check_branch
                %246 = sbr.rel target = $region92
              $region91: #{multi_headed_attention.4} parent=65 // pred_region
                _
              $region92: #{multi_headed_attention.4} parent=65 // pred_fallthru
                _
            $region66: #{multi_headed_attention.4} parent=61 // pred_fallthru
              _
            // Predicated region
            $region67: #{multi_headed_attention.4} parent=61 // pred_check
              _
            $region68: #{multi_headed_attention.4} parent=61 // pred_check_branch
              %217 = sbr.rel target = $region70
            $region69: #{multi_headed_attention.4} parent=61 // pred_region
              loop: start=0, step=1, limit=1
              $region71: #{multi_headed_attention.4} parent=69 // loop_pre_header
                _
              $region72: #{multi_headed_attention.4} parent=69 // loop_header
                %s220 = sphi 0, %s224
                %p221 = scmp.ge.s32.totalorder %s220, 1
                %s225 = sphi %s211, %s211
                %s226 = sphi %s206, %s206
              $region73: #{multi_headed_attention.4} parent=69 // loop_header_branch
                %223 = sbr.rel (%p221) target = $region77
              $region74: #{multi_headed_attention.4} parent=69 // loop_body
                %v227 = vld [vmem:[%s225] sm:$0xff]
                %228 = vst [vmem:[%s226] sm:$0xff] %v227
                %v229 = vld [vmem:[%s225 + $0x10] sm:$0xff]
                %230 = vst [vmem:[%s226 + $0x8] sm:$0xff] %v229
              $region75: #{multi_headed_attention.4} parent=69 // loop_footer
                %s224 = sadd.s32 1, %s220
              $region76: #{multi_headed_attention.4} parent=69 // loop_footer_branch
                %219 = sbr.rel target = $region72
              $region77: #{multi_headed_attention.4} parent=69 // loop_exit
                _
            $region70: #{multi_headed_attention.4} parent=61 // pred_fallthru
              _
          $region62: #{multi_headed_attention.4} parent=57 // pred_fallthru
            _
          %247 = vnop
        $region58: #{multi_headed_attention.4} parent=15 // pred_fallthru
          _
        // Predicated region
        $region93: #{multi_headed_attention.4} parent=15 // pred_check
          %p248 = pneg %p99
        $region94: #{multi_headed_attention.4} parent=15 // pred_check_branch
          %250 = sbr.rel (%p248) target = $region96
        $region95: #{multi_headed_attention.4} parent=15 // pred_region
          %s251 = sand.u32 %s89, 1
          %s252 = sand.u32 %s89, 1
          %s253 = smul.addr %s252, 16
          %s254 = scalar_lea.vmem [#allocation4], %s253
          %s255 = smul.u32 2, %s16
          %s256 = smul.addr %s255, 2
          %s257 = sadd.s32 %s17, %s256
          %s258 = smul.addr %s257, 8
          %s259 = scalar_lea.vmem %s2, %s258
          // Predicated region
          $region97: #{multi_headed_attention.4} parent=95 // pred_check
            _
          $region98: #{multi_headed_attention.4} parent=95 // pred_check_branch
            %261 = sbr.rel (0) target = $region100
          $region99: #{multi_headed_attention.4} parent=95 // pred_region
            // Predicated region
            $region101: #{multi_headed_attention.4} parent=99 // pred_check
              _
            $region102: #{multi_headed_attention.4} parent=99 // pred_check_branch
              %263 = sbr.rel (0) target = $region104
            $region103: #{multi_headed_attention.4} parent=99 // pred_region
              // Predicated region
              $region116: #{multi_headed_attention.4} parent=103 // pred_check
                _
              $region117: #{multi_headed_attention.4} parent=103 // pred_check_branch
                %280 = sbr.rel (0) target = $region119
              $region118: #{multi_headed_attention.4} parent=103 // pred_region
                loop: start=0, step=1, limit=1
                $region120: #{multi_headed_attention.4} parent=118 // loop_pre_header
                  _
                $region121: #{multi_headed_attention.4} parent=118 // loop_header
                  %s282 = sphi 0, %s286
                  %p283 = scmp.ge.s32.totalorder %s282, 1
                  %s287 = sphi %s259, %s259
                  %s288 = sphi %s254, %s254
                $region122: #{multi_headed_attention.4} parent=118 // loop_header_branch
                  %285 = sbr.rel (%p283) target = $region126
                $region123: #{multi_headed_attention.4} parent=118 // loop_body
                  %v289 = vld [vmem:[%s287] sm:$0xff]
                  %290 = vst [vmem:[%s288] sm:$0xff] %v289
                  %v291 = vld [vmem:[%s287 + $0x10] sm:$0xff]
                  %292 = vst [vmem:[%s288 + $0x8] sm:$0xff] %v291
                $region124: #{multi_headed_attention.4} parent=118 // loop_footer
                  %s286 = sadd.s32 1, %s282
                $region125: #{multi_headed_attention.4} parent=118 // loop_footer_branch
                  %281 = sbr.rel target = $region121
                $region126: #{multi_headed_attention.4} parent=118 // loop_exit
                  _
              $region119: #{multi_headed_attention.4} parent=103 // pred_fallthru
                _
              // Predicated region
              $region127: #{multi_headed_attention.4} parent=103 // pred_check
                _
              $region128: #{multi_headed_attention.4} parent=103 // pred_check_branch
                %294 = sbr.rel target = $region130
              $region129: #{multi_headed_attention.4} parent=103 // pred_region
                _
              $region130: #{multi_headed_attention.4} parent=103 // pred_fallthru
                _
            $region104: #{multi_headed_attention.4} parent=99 // pred_fallthru
              _
            // Predicated region
            $region105: #{multi_headed_attention.4} parent=99 // pred_check
              _
            $region106: #{multi_headed_attention.4} parent=99 // pred_check_branch
              %265 = sbr.rel target = $region108
            $region107: #{multi_headed_attention.4} parent=99 // pred_region
              loop: start=0, step=1, limit=1
              $region109: #{multi_headed_attention.4} parent=107 // loop_pre_header
                _
              $region110: #{multi_headed_attention.4} parent=107 // loop_header
                %s268 = sphi 0, %s272
                %p269 = scmp.ge.s32.totalorder %s268, 1
                %s273 = sphi %s259, %s259
                %s274 = sphi %s254, %s254
              $region111: #{multi_headed_attention.4} parent=107 // loop_header_branch
                %271 = sbr.rel (%p269) target = $region115
              $region112: #{multi_headed_attention.4} parent=107 // loop_body
                %v275 = vld [vmem:[%s273] sm:$0xff]
                %276 = vst [vmem:[%s274] sm:$0xff] %v275
                %v277 = vld [vmem:[%s273 + $0x10] sm:$0xff]
                %278 = vst [vmem:[%s274 + $0x8] sm:$0xff] %v277
              $region113: #{multi_headed_attention.4} parent=107 // loop_footer
                %s272 = sadd.s32 1, %s268
              $region114: #{multi_headed_attention.4} parent=107 // loop_footer_branch
                %267 = sbr.rel target = $region110
              $region115: #{multi_headed_attention.4} parent=107 // loop_exit
                _
            $region108: #{multi_headed_attention.4} parent=99 // pred_fallthru
              _
          $region100: #{multi_headed_attention.4} parent=95 // pred_fallthru
            _
          %295 = vnop
        $region96: #{multi_headed_attention.4} parent=15 // pred_fallthru
          _
      $region16: #{multi_headed_attention.4} parent=5 // pred_fallthru
        _
      %p296 = scmp.le.s32.totalorder 1, %s9
      %p297 = scmp.lt.s32.totalorder %s9, 3
      %p298 = pnand %p296, %p297
      %p299 = pneg %p298
      // Predicated region
      $region131: #{multi_headed_attention.4} parent=5 // pred_check
        _
      $region132: #{multi_headed_attention.4} parent=5 // pred_check_branch
        %301 = sbr.rel (%p298) target = $region134
      $region133: #{multi_headed_attention.4} parent=5 // pred_region
        %s302 = ssub.s32 %s9, 1
        %s303 = sand.u32 %s36, 1
        %s304 = sand.u32 %s36, 1
        %s305 = smul.addr %s304, 16
        %s306 = scalar_lea.vmem [#allocation2], %s305
        // Predicated region
        $region135: #{multi_headed_attention.4} parent=133 // pred_check
          %p307 = pneg %p49
        $region136: #{multi_headed_attention.4} parent=133 // pred_check_branch
          %309 = sbr.rel (%p307) target = $region138
        $region137: #{multi_headed_attention.4} parent=133 // pred_region
          _
        $region138: #{multi_headed_attention.4} parent=133 // pred_fallthru
          _
        %s310 = sand.u32 %s64, 1
        %s311 = sand.u32 %s64, 1
        %s312 = smul.addr %s311, 16
        %s313 = scalar_lea.vmem [#allocation3], %s312
        // Predicated region
        $region139: #{multi_headed_attention.4} parent=133 // pred_check
          %p314 = pneg %p77
        $region140: #{multi_headed_attention.4} parent=133 // pred_check_branch
          %316 = sbr.rel (%p314) target = $region142
        $region141: #{multi_headed_attention.4} parent=133 // pred_region
          _
        $region142: #{multi_headed_attention.4} parent=133 // pred_fallthru
          _
        %s317 = sand.u32 %s92, 1
        %s318 = sand.u32 %s92, 1
        %s319 = smul.addr %s318, 16
        %s320 = scalar_lea.vmem [#allocation4], %s319
        // Predicated region
        $region143: #{multi_headed_attention.4} parent=133 // pred_check
          %p321 = pneg %p105
        $region144: #{multi_headed_attention.4} parent=133 // pred_check_branch
          %323 = sbr.rel (%p321) target = $region146
        $region145: #{multi_headed_attention.4} parent=133 // pred_region
          _
        $region146: #{multi_headed_attention.4} parent=133 // pred_fallthru
          _
        %s324 = sand.u32 %s36, 1
        %s325 = sand.u32 %s36, 1
        %s326 = smul.addr %s325, 16
        %s327 = scalar_lea.vmem [#allocation2], %s326
        %p328 = pneg %p49
        %p329 = pneg %p46
        %s330 = sand.u32 %s64, 1
        %s331 = sand.u32 %s64, 1
        %s332 = smul.addr %s331, 16
        %s333 = scalar_lea.vmem [#allocation3], %s332
        %p334 = pneg %p77
        %p335 = pneg %p74
        %s336 = sand.u32 %s92, 1
        %s337 = sand.u32 %s92, 1
        %s338 = smul.addr %s337, 16
        %s339 = scalar_lea.vmem [#allocation4], %s338
        %p340 = pneg %p105
        %p341 = pneg %p102
        %p342 = pneg %p133
        %p343 = pneg %p130
        %s344 = sand.u32 %s120, 1
        %s345 = sand.u32 %s120, 1
        %s346 = smul.addr %s345, 16
        %s347 = scalar_lea.vmem [#allocation5], %s346
        %s348 = smul.u32 2, %s18
        %s349 = smul.u32 2, %s18
        %s350 = smul.u32 2, %s18
        %s351 = smul.u32 2, %s18
        %v352 = vld [vmem:[%s306] sm:$0xff]
        %v353 = vld [vmem:[%s306 + $0x8] sm:$0xff]
        %v354 = vmul.f32 %v352, 0.17677669
        %v355 = vmul.f32 %v353, 0.17677669
        %v356 = vld [vmem:[%s313] sm:$0xff]
        %v357 = vld [vmem:[%s313 + $0x8] sm:$0xff]
        %v358 = vld [vmem:[%s320] sm:$0xff]
        %v359 = vld [vmem:[%s320 + $0x8] sm:$0xff]
        %vm360 = vcmask 261120
        %v362 = vsel %vm360, %v354, 0
        %v365 = vsel %vm360, %v356, 0
        %367 = vmatprep.subr.mxu0 0.0
        %368 = vmatpush1.xpose.msra.mxu0 %v365
        %369 = vmatprep.subr.mxu0 0.0
        %370 = vmatpush1.xpose.msra.mxu0 0.0
        %371 = vmatprep.subr.mxu0 0.0
        %372 = vmatpush1.xpose.msra.mxu0 0.0
        %373 = vmatprep.subr.mxu0 0.0
        %374 = vmatpush1.xpose.msra.mxu0 0.0
        %375 = vmatprep.subr.mxu0 0.0
        %376 = vmatpush1.xpose.msra.mxu0 0.0
        %377 = vmatprep.subr.mxu0 0.0
        %378 = vmatpush1.xpose.msra.mxu0 0.0
        %379 = vmatprep.subr.mxu0 0.0
        %380 = vmatpush1.xpose.msra.mxu0 0.0
        %381 = vmatprep.subr.mxu0 0.0
        %382 = vmatpush1.xpose.msra.mxu0 0.0
        %383 = vmatprep.subr.mxu0 0.0
        %384 = vmatpush1.xpose.msra.mxu0 0.0
        %385 = vmatprep.subr.mxu0 0.0
        %386 = vmatpush1.xpose.msra.mxu0 0.0
        %387 = vmatprep.subr.mxu0 0.0
        %388 = vmatpush1.xpose.msra.mxu0 0.0
        %389 = vmatprep.subr.mxu0 0.0
        %390 = vmatpush1.xpose.msra.mxu0 0.0
        %391 = vmatprep.subr.mxu0 0.0
        %392 = vmatpush1.xpose.msra.mxu0 0.0
        %393 = vmatprep.subr.mxu0 0.0
        %394 = vmatpush1.xpose.msra.mxu0 0.0
        %395 = vmatprep.subr.mxu0 0.0
        %396 = vmatpush1.xpose.msra.mxu0 0.0
        %397 = vmatprep.subr.mxu0 0.0
        %398 = vmatpush1.xpose.msra.mxu0 0.0
        %399 = vmatprep.subr.mxu0 0.0
        %400 = vmatpush1.xpose.msra.mxu0 0.0
        %401 = vmatprep.subr.mxu0 0.0
        %402 = vmatpush1.xpose.msra.mxu0 0.0
        %403 = vmatprep.subr.mxu0 0.0
        %404 = vmatpush1.xpose.msra.mxu0 0.0
        %405 = vmatprep.subr.mxu0 0.0
        %406 = vmatpush1.xpose.msra.mxu0 0.0
        %407 = vmatprep.subr.mxu0 0.0
        %408 = vmatpush1.xpose.msra.mxu0 0.0
        %409 = vmatprep.subr.mxu0 0.0
        %410 = vmatpush1.xpose.msra.mxu0 0.0
        %411 = vmatprep.subr.mxu0 0.0
        %412 = vmatpush1.xpose.msra.mxu0 0.0
        %413 = vmatprep.subr.mxu0 0.0
        %414 = vmatpush1.xpose.msra.mxu0 0.0
        %415 = vmatprep.subr.mxu0 0.0
        %416 = vmatpush1.xpose.msra.mxu0 0.0
        %417 = vmatprep.subr.mxu0 0.0
        %418 = vmatpush1.xpose.msra.mxu0 0.0
        %419 = vmatprep.subr.mxu0 0.0
        %420 = vmatpush1.xpose.msra.mxu0 0.0
        %421 = vmatprep.subr.mxu0 0.0
        %422 = vmatpush1.xpose.msra.mxu0 0.0
        %423 = vmatprep.subr.mxu0 0.0
        %424 = vmatpush1.xpose.msra.mxu0 0.0
        %425 = vmatprep.subr.mxu0 0.0
        %426 = vmatpush1.xpose.msra.mxu0 0.0
        %427 = vmatprep.subr.mxu0 0.0
        %428 = vmatpush1.xpose.msra.mxu0 0.0
        %429 = vmatprep.subr.mxu0 0.0
        %430 = vmatpush1.xpose.msra.mxu0 0.0
        %431 = vmatprep.mubr.f32.mxu0 0.0
        %432 = vmatmul.mubr.f32.gmra.mrb[0].mxu0 %v362
        %v433 = vpop.f32.mrb[0].mxu0
        %v434 = vadd.f32 0.0, %v433
        %v435 = vpop.f32.mrb[0].mxu0
        %436 = vdwg.mxu0
        %v438 = vsel %vm360, %v355, 0
        %v441 = vsel %vm360, %v357, 0
        %443 = vmatprep.subr.mxu0 0.0
        %444 = vmatpush1.xpose.msra.mxu0 %v441
        %445 = vmatprep.subr.mxu0 0.0
        %446 = vmatpush1.xpose.msra.mxu0 0.0
        %447 = vmatprep.subr.mxu0 0.0
        %448 = vmatpush1.xpose.msra.mxu0 0.0
        %449 = vmatprep.subr.mxu0 0.0
        %450 = vmatpush1.xpose.msra.mxu0 0.0
        %451 = vmatprep.subr.mxu0 0.0
        %452 = vmatpush1.xpose.msra.mxu0 0.0
        %453 = vmatprep.subr.mxu0 0.0
        %454 = vmatpush1.xpose.msra.mxu0 0.0
        %455 = vmatprep.subr.mxu0 0.0
        %456 = vmatpush1.xpose.msra.mxu0 0.0
        %457 = vmatprep.subr.mxu0 0.0
        %458 = vmatpush1.xpose.msra.mxu0 0.0
        %459 = vmatprep.subr.mxu0 0.0
        %460 = vmatpush1.xpose.msra.mxu0 0.0
        %461 = vmatprep.subr.mxu0 0.0
        %462 = vmatpush1.xpose.msra.mxu0 0.0
        %463 = vmatprep.subr.mxu0 0.0
        %464 = vmatpush1.xpose.msra.mxu0 0.0
        %465 = vmatprep.subr.mxu0 0.0
        %466 = vmatpush1.xpose.msra.mxu0 0.0
        %467 = vmatprep.subr.mxu0 0.0
        %468 = vmatpush1.xpose.msra.mxu0 0.0
        %469 = vmatprep.subr.mxu0 0.0
        %470 = vmatpush1.xpose.msra.mxu0 0.0
        %471 = vmatprep.subr.mxu0 0.0
        %472 = vmatpush1.xpose.msra.mxu0 0.0
        %473 = vmatprep.subr.mxu0 0.0
        %474 = vmatpush1.xpose.msra.mxu0 0.0
        %475 = vmatprep.subr.mxu0 0.0
        %476 = vmatpush1.xpose.msra.mxu0 0.0
        %477 = vmatprep.subr.mxu0 0.0
        %478 = vmatpush1.xpose.msra.mxu0 0.0
        %479 = vmatprep.subr.mxu0 0.0
        %480 = vmatpush1.xpose.msra.mxu0 0.0
        %481 = vmatprep.subr.mxu0 0.0
        %482 = vmatpush1.xpose.msra.mxu0 0.0
        %483 = vmatprep.subr.mxu0 0.0
        %484 = vmatpush1.xpose.msra.mxu0 0.0
        %485 = vmatprep.subr.mxu0 0.0
        %486 = vmatpush1.xpose.msra.mxu0 0.0
        %487 = vmatprep.subr.mxu0 0.0
        %488 = vmatpush1.xpose.msra.mxu0 0.0
        %489 = vmatprep.subr.mxu0 0.0
        %490 = vmatpush1.xpose.msra.mxu0 0.0
        %491 = vmatprep.subr.mxu0 0.0
        %492 = vmatpush1.xpose.msra.mxu0 0.0
        %493 = vmatprep.subr.mxu0 0.0
        %494 = vmatpush1.xpose.msra.mxu0 0.0
        %495 = vmatprep.subr.mxu0 0.0
        %496 = vmatpush1.xpose.msra.mxu0 0.0
        %497 = vmatprep.subr.mxu0 0.0
        %498 = vmatpush1.xpose.msra.mxu0 0.0
        %499 = vmatprep.subr.mxu0 0.0
        %500 = vmatpush1.xpose.msra.mxu0 0.0
        %501 = vmatprep.subr.mxu0 0.0
        %502 = vmatpush1.xpose.msra.mxu0 0.0
        %503 = vmatprep.subr.mxu0 0.0
        %504 = vmatpush1.xpose.msra.mxu0 0.0
        %505 = vmatprep.subr.mxu0 0.0
        %506 = vmatpush1.xpose.msra.mxu0 0.0
        %507 = vmatprep.mubr.f32.mxu0 0.0
        %508 = vmatmul.mubr.f32.gmra.mrb[0].mxu0 %v438
        %v509 = vpop.f32.mrb[0].mxu0
        %v510 = vadd.f32 0.0, %v509
        %v511 = vpop.f32.mrb[0].mxu0
        %512 = vdwg.mxu0
        %vm513 = vcmask 64512
        %v514 = vsel %vm513, %v434, -inf
        %515 = vmax.xlane.f32.xlu0 %v514
        %v516 = vpop.xlane.xlu0 %515
        %v517 = vsel %vm513, %v510, -inf
        %518 = vmax.xlane.f32.xlu0 %v517
        %v519 = vpop.xlane.xlu0 %518
        %v520 = vsub.f32 %v434, %v516
        %v521 = vsub.f32 %v510, %v519
        %v522 = vmul.f32 %v520, 1.442695
        %v523 = vpow.pop %v522
        %v524 = vmul.f32 %v521, 1.442695
        %v525 = vpow.pop %v524
        %v526 = vsel %vm513, %v523, 0.0
        %527 = vadd.xlane.f32.xlu0 %v526
        %v528 = vpop.xlane.xlu0 %527
        %v529 = vsel %vm513, %v525, 0.0
        %530 = vadd.xlane.f32.xlu0 %v529
        %v531 = vpop.xlane.xlu0 %530
        %v532 = vrcp.pop %v528
        %v533 = vrcp.pop %v531
        %v534 = vmul.f32 %v523, %v532
        %v535 = vmul.f32 %v525, %v533
        %v537 = vsel %vm513, %v534, 0
        %539 = vmatprep.subr.mxu0 0.0
        %540 = vmatpush1.msra.mxu0 %v358
        %541 = vmatprep.subr.mxu0 0.0
        %542 = vmatpush1.msra.mxu0 0.0
        %543 = vmatprep.subr.mxu0 0.0
        %544 = vmatpush1.msra.mxu0 0.0
        %545 = vmatprep.subr.mxu0 0.0
        %546 = vmatpush1.msra.mxu0 0.0
        %547 = vmatprep.subr.mxu0 0.0
        %548 = vmatpush1.msra.mxu0 0.0
        %549 = vmatprep.subr.mxu0 0.0
        %550 = vmatpush1.msra.mxu0 0.0
        %551 = vmatprep.subr.mxu0 0.0
        %552 = vmatpush1.msra.mxu0 0.0
        %553 = vmatprep.subr.mxu0 0.0
        %554 = vmatpush1.msra.mxu0 0.0
        %555 = vmatprep.subr.mxu0 0.0
        %556 = vmatpush1.msra.mxu0 0.0
        %557 = vmatprep.subr.mxu0 0.0
        %558 = vmatpush1.msra.mxu0 0.0
        %559 = vmatprep.subr.mxu0 0.0
        %560 = vmatpush1.msra.mxu0 0.0
        %561 = vmatprep.subr.mxu0 0.0
        %562 = vmatpush1.msra.mxu0 0.0
        %563 = vmatprep.subr.mxu0 0.0
        %564 = vmatpush1.msra.mxu0 0.0
        %565 = vmatprep.subr.mxu0 0.0
        %566 = vmatpush1.msra.mxu0 0.0
        %567 = vmatprep.subr.mxu0 0.0
        %568 = vmatpush1.msra.mxu0 0.0
        %569 = vmatprep.subr.mxu0 0.0
        %570 = vmatpush1.msra.mxu0 0.0
        %571 = vmatprep.subr.mxu0 0.0
        %572 = vmatpush1.msra.mxu0 0.0
        %573 = vmatprep.subr.mxu0 0.0
        %574 = vmatpush1.msra.mxu0 0.0
        %575 = vmatprep.subr.mxu0 0.0
        %576 = vmatpush1.msra.mxu0 0.0
        %577 = vmatprep.subr.mxu0 0.0
        %578 = vmatpush1.msra.mxu0 0.0
        %579 = vmatprep.subr.mxu0 0.0
        %580 = vmatpush1.msra.mxu0 0.0
        %581 = vmatprep.subr.mxu0 0.0
        %582 = vmatpush1.msra.mxu0 0.0
        %583 = vmatprep.subr.mxu0 0.0
        %584 = vmatpush1.msra.mxu0 0.0
        %585 = vmatprep.subr.mxu0 0.0
        %586 = vmatpush1.msra.mxu0 0.0
        %587 = vmatprep.subr.mxu0 0.0
        %588 = vmatpush1.msra.mxu0 0.0
        %589 = vmatprep.subr.mxu0 0.0
        %590 = vmatpush1.msra.mxu0 0.0
        %591 = vmatprep.subr.mxu0 0.0
        %592 = vmatpush1.msra.mxu0 0.0
        %593 = vmatprep.subr.mxu0 0.0
        %594 = vmatpush1.msra.mxu0 0.0
        %595 = vmatprep.subr.mxu0 0.0
        %596 = vmatpush1.msra.mxu0 0.0
        %597 = vmatprep.subr.mxu0 0.0
        %598 = vmatpush1.msra.mxu0 0.0
        %599 = vmatprep.subr.mxu0 0.0
        %600 = vmatpush1.msra.mxu0 0.0
        %601 = vmatprep.subr.mxu0 0.0
        %602 = vmatpush1.msra.mxu0 0.0
        %603 = vmatprep.mubr.f32.mxu0 0.0
        %604 = vmatmul.mubr.f32.gmra.mrb[0].mxu0 %v537
        %v605 = vpop.f32.mrb[0].mxu0
        %v606 = vadd.f32 0.0, %v605
        %v607 = vpop.f32.mrb[0].mxu0
        %608 = vdwg.mxu0
        %v610 = vsel %vm513, %v535, 0
        %612 = vmatprep.subr.mxu0 0.0
        %613 = vmatpush1.msra.mxu0 %v359
        %614 = vmatprep.subr.mxu0 0.0
        %615 = vmatpush1.msra.mxu0 0.0
        %616 = vmatprep.subr.mxu0 0.0
        %617 = vmatpush1.msra.mxu0 0.0
        %618 = vmatprep.subr.mxu0 0.0
        %619 = vmatpush1.msra.mxu0 0.0
        %620 = vmatprep.subr.mxu0 0.0
        %621 = vmatpush1.msra.mxu0 0.0
        %622 = vmatprep.subr.mxu0 0.0
        %623 = vmatpush1.msra.mxu0 0.0
        %624 = vmatprep.subr.mxu0 0.0
        %625 = vmatpush1.msra.mxu0 0.0
        %626 = vmatprep.subr.mxu0 0.0
        %627 = vmatpush1.msra.mxu0 0.0
        %628 = vmatprep.subr.mxu0 0.0
        %629 = vmatpush1.msra.mxu0 0.0
        %630 = vmatprep.subr.mxu0 0.0
        %631 = vmatpush1.msra.mxu0 0.0
        %632 = vmatprep.subr.mxu0 0.0
        %633 = vmatpush1.msra.mxu0 0.0
        %634 = vmatprep.subr.mxu0 0.0
        %635 = vmatpush1.msra.mxu0 0.0
        %636 = vmatprep.subr.mxu0 0.0
        %637 = vmatpush1.msra.mxu0 0.0
        %638 = vmatprep.subr.mxu0 0.0
        %639 = vmatpush1.msra.mxu0 0.0
        %640 = vmatprep.subr.mxu0 0.0
        %641 = vmatpush1.msra.mxu0 0.0
        %642 = vmatprep.subr.mxu0 0.0
        %643 = vmatpush1.msra.mxu0 0.0
        %644 = vmatprep.subr.mxu0 0.0
        %645 = vmatpush1.msra.mxu0 0.0
        %646 = vmatprep.subr.mxu0 0.0
        %647 = vmatpush1.msra.mxu0 0.0
        %648 = vmatprep.subr.mxu0 0.0
        %649 = vmatpush1.msra.mxu0 0.0
        %650 = vmatprep.subr.mxu0 0.0
        %651 = vmatpush1.msra.mxu0 0.0
        %652 = vmatprep.subr.mxu0 0.0
        %653 = vmatpush1.msra.mxu0 0.0
        %654 = vmatprep.subr.mxu0 0.0
        %655 = vmatpush1.msra.mxu0 0.0
        %656 = vmatprep.subr.mxu0 0.0
        %657 = vmatpush1.msra.mxu0 0.0
        %658 = vmatprep.subr.mxu0 0.0
        %659 = vmatpush1.msra.mxu0 0.0
        %660 = vmatprep.subr.mxu0 0.0
        %661 = vmatpush1.msra.mxu0 0.0
        %662 = vmatprep.subr.mxu0 0.0
        %663 = vmatpush1.msra.mxu0 0.0
        %664 = vmatprep.subr.mxu0 0.0
        %665 = vmatpush1.msra.mxu0 0.0
        %666 = vmatprep.subr.mxu0 0.0
        %667 = vmatpush1.msra.mxu0 0.0
        %668 = vmatprep.subr.mxu0 0.0
        %669 = vmatpush1.msra.mxu0 0.0
        %670 = vmatprep.subr.mxu0 0.0
        %671 = vmatpush1.msra.mxu0 0.0
        %672 = vmatprep.subr.mxu0 0.0
        %673 = vmatpush1.msra.mxu0 0.0
        %674 = vmatprep.subr.mxu0 0.0
        %675 = vmatpush1.msra.mxu0 0.0
        %676 = vmatprep.mubr.f32.mxu0 0.0
        %677 = vmatmul.mubr.f32.gmra.mrb[0].mxu0 %v610
        %v678 = vpop.f32.mrb[0].mxu0
        %v679 = vadd.f32 0.0, %v678
        %v680 = vpop.f32.mrb[0].mxu0
        %681 = vdwg.mxu0
        %682 = vst.msk [vmem:[%s347] sm:$0xff] %vm360, %v606
        %683 = vst.msk [vmem:[%s347 + $0x8] sm:$0xff] %vm360, %v679
        %s684 = sand.u32 %s120, 1
        %s685 = sand.u32 %s120, 1
        %s686 = smul.addr %s685, 16
        %s687 = scalar_lea.vmem [#allocation5], %s686
        // Predicated region
        $region147: #{multi_headed_attention.4} parent=133 // pred_check
          %p688 = pneg %p130
        $region148: #{multi_headed_attention.4} parent=133 // pred_check_branch
          %690 = sbr.rel (%p688) target = $region150
        $region149: #{multi_headed_attention.4} parent=133 // pred_region
          %s691 = smul.u32 2, %s18
          %s692 = smul.addr %s691, 2
          %s693 = sadd.s32 %s19, %s692
          %s694 = smul.addr %s693, 8
          %s695 = scalar_lea.vmem %s3, %s694
          // Predicated region
          $region151: #{multi_headed_attention.4} parent=149 // pred_check
            _
          $region152: #{multi_headed_attention.4} parent=149 // pred_check_branch
            %697 = sbr.rel (0) target = $region154
          $region153: #{multi_headed_attention.4} parent=149 // pred_region
            // Predicated region
            $region155: #{multi_headed_attention.4} parent=153 // pred_check
              _
            $region156: #{multi_headed_attention.4} parent=153 // pred_check_branch
              %699 = sbr.rel (0) target = $region158
            $region157: #{multi_headed_attention.4} parent=153 // pred_region
              // Predicated region
              $region170: #{multi_headed_attention.4} parent=157 // pred_check
                _
              $region171: #{multi_headed_attention.4} parent=157 // pred_check_branch
                %716 = sbr.rel (0) target = $region173
              $region172: #{multi_headed_attention.4} parent=157 // pred_region
                loop: start=0, step=1, limit=1
                $region174: #{multi_headed_attention.4} parent=172 // loop_pre_header
                  _
                $region175: #{multi_headed_attention.4} parent=172 // loop_header
                  %s718 = sphi 0, %s722
                  %p719 = scmp.ge.s32.totalorder %s718, 1
                  %s723 = sphi %s687, %s687
                  %s724 = sphi %s695, %s695
                $region176: #{multi_headed_attention.4} parent=172 // loop_header_branch
                  %721 = sbr.rel (%p719) target = $region180
                $region177: #{multi_headed_attention.4} parent=172 // loop_body
                  %v725 = vld [vmem:[%s723] sm:$0xff]
                  %726 = vst [vmem:[%s724] sm:$0xff] %v725
                  %v727 = vld [vmem:[%s723 + $0x8] sm:$0xff]
                  %728 = vst [vmem:[%s724 + $0x10] sm:$0xff] %v727
                $region178: #{multi_headed_attention.4} parent=172 // loop_footer
                  %s722 = sadd.s32 1, %s718
                $region179: #{multi_headed_attention.4} parent=172 // loop_footer_branch
                  %717 = sbr.rel target = $region175
                $region180: #{multi_headed_attention.4} parent=172 // loop_exit
                  _
              $region173: #{multi_headed_attention.4} parent=157 // pred_fallthru
                _
              // Predicated region
              $region181: #{multi_headed_attention.4} parent=157 // pred_check
                _
              $region182: #{multi_headed_attention.4} parent=157 // pred_check_branch
                %730 = sbr.rel target = $region184
              $region183: #{multi_headed_attention.4} parent=157 // pred_region
                _
              $region184: #{multi_headed_attention.4} parent=157 // pred_fallthru
                _
            $region158: #{multi_headed_attention.4} parent=153 // pred_fallthru
              _
            // Predicated region
            $region159: #{multi_headed_attention.4} parent=153 // pred_check
              _
            $region160: #{multi_headed_attention.4} parent=153 // pred_check_branch
              %701 = sbr.rel target = $region162
            $region161: #{multi_headed_attention.4} parent=153 // pred_region
              loop: start=0, step=1, limit=1
              $region163: #{multi_headed_attention.4} parent=161 // loop_pre_header
                _
              $region164: #{multi_headed_attention.4} parent=161 // loop_header
                %s704 = sphi 0, %s708
                %p705 = scmp.ge.s32.totalorder %s704, 1
                %s709 = sphi %s687, %s687
                %s710 = sphi %s695, %s695
              $region165: #{multi_headed_attention.4} parent=161 // loop_header_branch
                %707 = sbr.rel (%p705) target = $region169
              $region166: #{multi_headed_attention.4} parent=161 // loop_body
                %v711 = vld [vmem:[%s709] sm:$0xff]
                %712 = vst [vmem:[%s710] sm:$0xff] %v711
                %v713 = vld [vmem:[%s709 + $0x8] sm:$0xff]
                %714 = vst [vmem:[%s710 + $0x10] sm:$0xff] %v713
              $region167: #{multi_headed_attention.4} parent=161 // loop_footer
                %s708 = sadd.s32 1, %s704
              $region168: #{multi_headed_attention.4} parent=161 // loop_footer_branch
                %703 = sbr.rel target = $region164
              $region169: #{multi_headed_attention.4} parent=161 // loop_exit
                _
            $region162: #{multi_headed_attention.4} parent=153 // pred_fallthru
              _
          $region154: #{multi_headed_attention.4} parent=149 // pred_fallthru
            _
          %731 = vnop
        $region150: #{multi_headed_attention.4} parent=133 // pred_fallthru
          _
      $region134: #{multi_headed_attention.4} parent=5 // pred_fallthru
        _
      %p732 = scmp.le.s32.totalorder 2, %s9
      // Predicated region
      $region185: #{multi_headed_attention.4} parent=5 // pred_check
        %p733 = pneg %p732
      $region186: #{multi_headed_attention.4} parent=5 // pred_check_branch
        %735 = sbr.rel (%p733) target = $region188
      $region187: #{multi_headed_attention.4} parent=5 // pred_region
        %s736 = ssub.s32 %s9, 2
        // Predicated region
        $region189: #{multi_headed_attention.4} parent=187 // pred_check
          %p737 = pneg %p136
        $region190: #{multi_headed_attention.4} parent=187 // pred_check_branch
          %739 = sbr.rel (%p737) target = $region192
        $region191: #{multi_headed_attention.4} parent=187 // pred_region
          %s740 = sand.u32 %s121, 1
          %s741 = sand.u32 %s121, 1
          %s742 = smul.addr %s741, 16
          %s743 = scalar_lea.vmem [#allocation5], %s742
        $region192: #{multi_headed_attention.4} parent=187 // pred_fallthru
          _
      $region188: #{multi_headed_attention.4} parent=5 // pred_fallthru
        _
    $region6: #{multi_headed_attention.4} parent=1 // loop_footer
      %s13 = sadd.s32 1, %s9
    $region7: #{multi_headed_attention.4} parent=1 // loop_footer_branch
      %8 = sbr.rel target = $region3
    $region8: #{multi_headed_attention.4} parent=1 // loop_exit
      _

// kernel: multi_headed_attention.5
$region0: #{multi_headed_attention.5}
  #allocation0 [shape = 'u32[]', space=smem, size = 0x4, offset = 0x4, fixed_abs, tag = 'smem constant byte address 0x4 - core index']
  #allocation1 [shape = 'u32[144,128]{1,0:T(1,128)}', space=vmem, size = 0x12000, scoped, tag = 'internal scratch']
  %s0 = inlined_call_operand.vmem [shape: f32[16,64], index: 0, kind: input, shape index: {}]
  %s1 = inlined_call_operand.vmem [shape: f32[64,64], index: 1, kind: input, shape index: {}]
  %s2 = inlined_call_operand.vmem [shape: f32[1,64], index: 2, kind: input, shape index: {}]
  %s3 = inlined_call_operand.hbm [shape: f32[16,64], index: 3, kind: output, shape index: {}]
  %s4 = sld [smem:[#allocation0]]
  $region22: #{multi_headed_attention.5} parent=0
    _
  %s6 = ssub.s32 1, %s4
  %s7 = scalar_select 0, %s6, %s4
  $region1: #{multi_headed_attention.5} parent=0
    #allocation2 [shape = 'u8[8192]{0}', space=vmem, size = 0x2000, scoped, tag = 'output window, operand 0, single buffered']
    #allocation3 [shape = 's32[1]{0}', space=sflag, size = 0x4, scoped, tag = 'scoped memory for multi_headed_attention.5']
    %8 = vsyncpa [#allocation3], 0
    // Predicated region
    $region2: #{multi_headed_attention.5} parent=1 // pred_check
      _
    $region3: #{multi_headed_attention.5} parent=1 // pred_check_branch
      %10 = sbr.rel (0) target = $region5
    $region4: #{multi_headed_attention.5} parent=1 // pred_region
      _
    $region5: #{multi_headed_attention.5} parent=1 // pred_fallthru
      _
    // Predicated region
    $region6: #{multi_headed_attention.5} parent=1 // pred_check
      _
    $region7: #{multi_headed_attention.5} parent=1 // pred_check_branch
      %12 = sbr.rel (0) target = $region9
    $region8: #{multi_headed_attention.5} parent=1 // pred_region
      _
    $region9: #{multi_headed_attention.5} parent=1 // pred_fallthru
      _
    // Predicated region
    $region10: #{multi_headed_attention.5} parent=1 // pred_check
      _
    $region11: #{multi_headed_attention.5} parent=1 // pred_check_branch
      %14 = sbr.rel (0) target = $region13
    $region12: #{multi_headed_attention.5} parent=1 // pred_region
      _
    $region13: #{multi_headed_attention.5} parent=1 // pred_fallthru
      _
    %v15 = vld [vmem:[%s0] sm:$0xff]
    %v16 = vld [vmem:[%s0 + $0x8] sm:$0xff]
    %v17 = vld [vmem:[%s1] sm:$0xff]
    %v18 = vld [vmem:[%s1 + $0x8] sm:$0xff]
    %v19 = vld [vmem:[%s1 + $0x10] sm:$0xff]
    %v20 = vld [vmem:[%s1 + $0x18] sm:$0xff]
    %v21 = vld [vmem:[%s1 + $0x20] sm:$0xff]
    %v22 = vld [vmem:[%s1 + $0x28] sm:$0xff]
    %v23 = vld [vmem:[%s1 + $0x30] sm:$0xff]
    %v24 = vld [vmem:[%s1 + $0x38] sm:$0xff]
    %v25 = vld [vmem:[%s2] sm:$0x1]
    %v27 = vlaneseq
    %v28 = vshrl.u32 %v27, 7
    %v29 = vsub.s32 0, %v28
    %v30 = vrot.slane %v25, %v29
    %vm32 = vcmask 523264
    %v34 = vsel %vm32, %v15, 0
    %v37 = vsel %vm32, %v16, 0
    %39 = vmatprep.subr.mxu0 0.0
    %40 = vmatpush1.msra.mxu0 %v17
    %41 = vmatprep.subr.mxu0 0.0
    %42 = vmatpush1.msra.mxu0 %v18
    %43 = vmatprep.subr.mxu0 0.0
    %44 = vmatpush1.msra.mxu0 %v19
    %45 = vmatprep.subr.mxu0 0.0
    %46 = vmatpush1.msra.mxu0 %v20
    %47 = vmatprep.subr.mxu0 0.0
    %48 = vmatpush1.msra.mxu0 %v21
    %49 = vmatprep.subr.mxu0 0.0
    %50 = vmatpush1.msra.mxu0 %v22
    %51 = vmatprep.subr.mxu0 0.0
    %52 = vmatpush1.msra.mxu0 %v23
    %53 = vmatprep.subr.mxu0 0.0
    %54 = vmatpush1.msra.mxu0 %v24
    %55 = vmatprep.subr.mxu0 0.0
    %56 = vmatpush1.msra.mxu0 0.0
    %57 = vmatprep.subr.mxu0 0.0
    %58 = vmatpush1.msra.mxu0 0.0
    %59 = vmatprep.subr.mxu0 0.0
    %60 = vmatpush1.msra.mxu0 0.0
    %61 = vmatprep.subr.mxu0 0.0
    %62 = vmatpush1.msra.mxu0 0.0
    %63 = vmatprep.subr.mxu0 0.0
    %64 = vmatpush1.msra.mxu0 0.0
    %65 = vmatprep.subr.mxu0 0.0
    %66 = vmatpush1.msra.mxu0 0.0
    %67 = vmatprep.subr.mxu0 0.0
    %68 = vmatpush1.msra.mxu0 0.0
    %69 = vmatprep.subr.mxu0 0.0
    %70 = vmatpush1.msra.mxu0 0.0
    %71 = vmatprep.subr.mxu0 0.0
    %72 = vmatpush1.msra.mxu0 0.0
    %73 = vmatprep.subr.mxu0 0.0
    %74 = vmatpush1.msra.mxu0 0.0
    %75 = vmatprep.subr.mxu0 0.0
    %76 = vmatpush1.msra.mxu0 0.0
    %77 = vmatprep.subr.mxu0 0.0
    %78 = vmatpush1.msra.mxu0 0.0
    %79 = vmatprep.subr.mxu0 0.0
    %80 = vmatpush1.msra.mxu0 0.0
    %81 = vmatprep.subr.mxu0 0.0
    %82 = vmatpush1.msra.mxu0 0.0
    %83 = vmatprep.subr.mxu0 0.0
    %84 = vmatpush1.msra.mxu0 0.0
    %85 = vmatprep.subr.mxu0 0.0
    %86 = vmatpush1.msra.mxu0 0.0
    %87 = vmatprep.subr.mxu0 0.0
    %88 = vmatpush1.msra.mxu0 0.0
    %89 = vmatprep.subr.mxu0 0.0
    %90 = vmatpush1.msra.mxu0 0.0
    %91 = vmatprep.subr.mxu0 0.0
    %92 = vmatpush1.msra.mxu0 0.0
    %93 = vmatprep.subr.mxu0 0.0
    %94 = vmatpush1.msra.mxu0 0.0
    %95 = vmatprep.subr.mxu0 0.0
    %96 = vmatpush1.msra.mxu0 0.0
    %97 = vmatprep.subr.mxu0 0.0
    %98 = vmatpush1.msra.mxu0 0.0
    %99 = vmatprep.subr.mxu0 0.0
    %100 = vmatpush1.msra.mxu0 0.0
    %101 = vmatprep.subr.mxu0 0.0
    %102 = vmatpush1.msra.mxu0 0.0
    %103 = vmatprep.mubr.f32.mxu0 0.0
    %104 = vmatmul.mubr.f32.gmra.mrb[0].mxu0 %v34
    %v105 = vpop.f32.mrb[0].mxu0
    %v106 = vadd.f32 %v30, %v105
    %v107 = vpop.f32.mrb[0].mxu0
    %108 = vmatprep.mubr.f32.mxu0 0.0
    %109 = vmatmul.mubr.f32.gmra.mrb[0].mxu0 %v37
    %v110 = vpop.f32.mrb[0].mxu0
    %v111 = vadd.f32 %v30, %v110
    %v112 = vpop.f32.mrb[0].mxu0
    %113 = vdwg.mxu0
    %114 = vst.msk [vmem:[#allocation2] sm:$0xff] %vm32, %v106
    %115 = vst.msk [vmem:[#allocation2 + $0x8] sm:$0xff] %vm32, %v111
    // Predicated region
    $region14: #{multi_headed_attention.5} parent=1 // pred_check
      _
    $region15: #{multi_headed_attention.5} parent=1 // pred_check_branch
      %117 = sbr.rel (0) target = $region17
    $region16: #{multi_headed_attention.5} parent=1 // pred_region
      %s119 = ssub.s32 256, 256
      %120 = vsyncadd [#allocation3], %s119
      %s121 = sshll.u32 [#allocation2], 4
      %s122 = int_to_ptr.vmem [resolvable:$true] %s121
      %127 = dma.vmem_to_hbm [thread:$0]  %s122, 256, %s3, [#allocation3], 128, 128, 8
    $region17: #{multi_headed_attention.5} parent=1 // pred_fallthru
      _
    // Predicated region
    $region18: #{multi_headed_attention.5} parent=1 // pred_check
      _
    $region19: #{multi_headed_attention.5} parent=1 // pred_check_branch
      %129 = sbr.rel (0) target = $region21
    $region20: #{multi_headed_attention.5} parent=1 // pred_region
      %130 = dma.done [#allocation3], 256
    $region21: #{multi_headed_attention.5} parent=1 // pred_fallthru
      _
    %131 = vsyncpa [#allocation3], 1

</llo_original>
